<compile_context>
chip_gen: v7x
topology: tpu7x:2x2x1
jax: 0.10.0
libtpu: 0.0.40
codegen_flags: <defaults>
</compile_context>

<pallas_src>
import jax
import jax.numpy as jnp
from jax.experimental import pallas as pl
from jax.experimental.pallas import tpu as pltpu

POOL = 101  # AvgPool1d kernel size (and stride) from the module


def temporal_pooling_kernel(x_ref, w_ref, b_ref, out_ref):
    # x_ref: (tn, S*C)  w_ref: (S*C, Cp)  b_ref: (1, Cp)  out_ref: (tn, Cp)
    # Pool + fc1..fc4 are all folded into one affine map: a single MXU matmul
    # with f32 accumulation, plus a bias add.
    h = jnp.dot(x_ref[...], w_ref[...], preferred_element_type=jnp.float32)
    out_ref[...] = (h + b_ref[...]).astype(out_ref.dtype)


def temporal_pooling_phn(x, params):
    """x: (N, S, C), with POOL <= S < 2*POOL.  Returns (N, 1, C)."""
    N, S, C = x.shape
    if not (POOL <= S < 2 * POOL):
        # AvgPool1d(101) + squeeze(2) in the reference module only works for a
        # single pooling window; guard instead of silently dropping samples.
        raise ValueError(f"samples={S} must be in [{POOL}, {2 * POOL - 1}]")

    (w1, b1), (w2, b2), (w3, b3), (w4, b4) = params

    # Fuse the 4 activation-free Linear layers into one affine transform
    # (trace-time; torch Linear is y = x @ W^T + b with W of shape (out, in)).
    w_eff = w1.T @ w2.T @ w3.T @ w4.T                         # (C, C)
    b_eff = ((b1 @ w2.T + b2) @ w3.T + b3) @ w4.T + b4        # (C,)

    # Pad output channels to a multiple of 128 lanes for lane-dense stores.
    c_pad = ((C + 127) // 128) * 128
    if c_pad != C:
        w_eff = jnp.pad(w_eff, ((0, 0), (0, c_pad - C)))
        b_eff = jnp.pad(b_eff, (0, c_pad - C))

    # Fold AvgPool1d(101) (mean over the first POOL samples, incl. the 1/POOL
    # scale) into a single (S*C, c_pad) weight: W_big[s*C+c, :] =
    # pool_scale[s] * w_eff[c, :].  The kernel then sees a lane-dense x tile.
    pool_scale = jnp.where(jnp.arange(S) < POOL, 1.0 / POOL, 0.0)
    pool_scale = pool_scale.astype(jnp.float32)               # (S,)
    w_big = pool_scale[:, None, None] * w_eff[None, :, :].astype(jnp.float32)
    w_big = w_big.reshape(S * C, c_pad)

    # Keep weights in bf16 when x is bf16 (half the weight DMA / VMEM, full-
    # rate bf16 MXU); accumulation is f32 via preferred_element_type.
    w_dtype = jnp.bfloat16 if x.dtype == jnp.bfloat16 else jnp.float32
    w_big = w_big.astype(w_dtype)
    b_big = b_eff.astype(jnp.float32).reshape(1, c_pad)

    K = S * C
    x_flat = x.reshape(N, K)   # free reshape; last dim ~97% lane occupancy

    # Size the batch tile from the real resident VMEM footprint:
    #   2*tn*K (double-buffered x) + 2*tn*c_pad (output) + 2*K*c_pad (weight),
    # budgeted at ~40 MiB so it fits v7x's 64 MiB physical VMEM (and the 48
    # MiB scoped limit we request below) with compiler-scratch headroom.
    itemsize = jnp.dtype(x.dtype).itemsize
    x_row_bytes = K * itemsize
    out_row_bytes = c_pad * itemsize
    w_bytes = K * c_pad * jnp.dtype(w_dtype).itemsize + c_pad * 4
    budget = 40 << 20
    avail = max(budget - 2 * w_bytes, 1 << 20)
    tn_max = max(int(avail // (2 * (x_row_bytes + out_row_bytes))), 1)

    if tn_max >= N:
        tn = N
        # Megacore (v7x): when the batch is big enough, force >= 2 parallel
        # grid steps so both TensorCores get work.
        if N >= 16:
            tn = min(tn, max(8, (((N + 1) // 2 + 7) // 8) * 8))
    else:
        tn = max(8, (tn_max // 8) * 8)
    tn = min(tn, N)

    grid = (pl.cdiv(N, tn),)

    cost = pl.CostEstimate(
        flops=2 * N * K * c_pad,
        transcendentals=0,
        bytes_accessed=(N * x_row_bytes
                        + K * c_pad * jnp.dtype(w_dtype).itemsize
                        + N * out_row_bytes),
    )

    out = pl.pallas_call(
        temporal_pooling_kernel,
        out_shape=jax.ShapeDtypeStruct((N, c_pad), x.dtype),
        grid=grid,
        in_specs=[
            pl.BlockSpec((tn, K), lambda i: (i, 0)),          # x tile (lane-dense)
            pl.BlockSpec((K, c_pad), lambda i: (0, 0)),       # fused pool+fc weight
            pl.BlockSpec((1, c_pad), lambda i: (0, 0)),       # fused bias
        ],
        out_specs=pl.BlockSpec((tn, c_pad), lambda i: (i, 0)),
        compiler_params=pltpu.CompilerParams(
            dimension_semantics=("parallel",),
            vmem_limit_bytes=48 << 20),
        cost_estimate=cost,
    )(x_flat, w_big, b_big)

    # Drop lane padding; unsqueeze(2).permute(0, 2, 1) -> (N, 1, C).
    return out[:, :C].reshape(N, 1, C)


def _init_params(key, n_channels):
    """Deterministic init mimicking torch.nn.Linear default (uniform +-1/sqrt(in))."""
    params = []
    bound = 1.0 / jnp.sqrt(jnp.float32(n_channels))
    for i in range(4):
        kw, kb = jax.random.split(jax.random.fold_in(key, i))
        w = jax.random.uniform(kw, (n_channels, n_channels), jnp.float32,
                               minval=-bound, maxval=bound)
        b = jax.random.uniform(kb, (n_channels,), jnp.float32,
                               minval=-bound, maxval=bound)
        params.append((w, b))
    return params


def _reference(x, params):
    """Pure-JAX reference of the PyTorch forward (layer by layer)."""
    tap = jnp.mean(x[:, :POOL, :], axis=1)          # (N, C)
    h = tap
    for w, b in params:
        h = h @ w.T + b
    return h[:, None, :]                            # (N, 1, C)


if __name__ == "__main__":
    key = jax.random.PRNGKey(0)
    kx, kp = jax.random.split(key)

    N, S, C = 2, 101, 32        # samples=101 so AvgPool1d(101) -> length 1
    x = jax.random.normal(kx, (N, S, C), jnp.float32)
    params = _init_params(kp, C)

    out = jax.jit(temporal_pooling_phn)(x, params)
    out = jax.block_until_ready(out)

    ref = _reference(x, params)
    assert out.shape == (N, 1, C), out.shape
    assert jnp.allclose(out, ref, atol=1e-4, rtol=1e-4), \
        float(jnp.max(jnp.abs(out - ref)))

    print("KERNEL_OK")
</pallas_src>

<mosaic_0001>
module attributes {stable_mosaic.version = 11 : i64} {
  func.func @temporal_pooling_kernel(%arg0: i32, %arg1: memref<2x3232xf32, #tpu.memory_space<vmem>>, %arg2: memref<3232x128xf32, #tpu.memory_space<vmem>>, %arg3: memref<1x128xf32, #tpu.memory_space<vmem>>, %arg4: memref<2x128xf32, #tpu.memory_space<vmem>>) attributes {dimension_semantics = [#tpu.dimension_semantics<parallel>], iteration_bounds = array<i64: 1>, scalar_prefetch = 0 : i64, scratch_operands = 0 : i64, tpu.core_type = #tpu.core_type<tc>, window_params = [{transform_indices = @transform_0, window_bounds = array<i64: 2, 3232>}, {pipeline_mode = #tpu.pipeline_mode<synchronous>, transform_indices = @transform_1, window_bounds = array<i64: 3232, 128>}, {pipeline_mode = #tpu.pipeline_mode<synchronous>, transform_indices = @transform_2, window_bounds = array<i64: 1, 128>}, {transform_indices = @transform_3, window_bounds = array<i64: 2, 128>}]} {
    %c0 = arith.constant 0 : index
    %c0_0 = arith.constant 0 : index
    %0 = vector.load %arg1[%c0, %c0_0] : memref<2x3232xf32, #tpu.memory_space<vmem>>, vector<2x3232xf32>
    %c0_1 = arith.constant 0 : index
    %c0_2 = arith.constant 0 : index
    %1 = vector.load %arg2[%c0_1, %c0_2] : memref<3232x128xf32, #tpu.memory_space<vmem>>, vector<3232x128xf32>
    %cst = arith.constant dense<0.000000e+00> : vector<2x128xf32>
    %2 = tpu.matmul %0, %1, %cst {dimension_numbers = #tpu.dot_dimension_numbers<[1], [0], [0], [1], [0, 0, 1, 1], [], []>} : vector<2x3232xf32>, vector<3232x128xf32>, vector<2x128xf32> -> vector<2x128xf32>
    %c0_3 = arith.constant 0 : index
    %c0_4 = arith.constant 0 : index
    %3 = vector.load %arg3[%c0_3, %c0_4] : memref<1x128xf32, #tpu.memory_space<vmem>>, vector<1x128xf32>
    %4 = vector.broadcast %3 : vector<1x128xf32> to vector<2x128xf32>
    %5 = arith.addf %2, %4 : vector<2x128xf32>
    %c0_5 = arith.constant 0 : index
    %c0_6 = arith.constant 0 : index
    %6 = vector.load %arg4[%c0_5, %c0_6] : memref<2x128xf32, #tpu.memory_space<vmem>>, vector<2x128xf32>
    tpu.vector_store %arg4[%c0_5, %c0_6], %5 {strides = array<i32>} : memref<2x128xf32, #tpu.memory_space<vmem>>, vector<2x128xf32>,
    return
  }
  func.func @transform_0(%arg0: i32) -> (i32, i32) {
    %c0_i32 = arith.constant 0 : i32
    %c0_i32_0 = arith.constant 0 : i32
    return %arg0, %c0_i32 : i32, i32
  }
  func.func @transform_1(%arg0: i32) -> (i32, i32) {
    %c0_i32 = arith.constant 0 : i32
    %c0_i32_0 = arith.constant 0 : i32
    %c0_i32_1 = arith.constant 0 : i32
    return %c0_i32, %c0_i32_0 : i32, i32
  }
  func.func @transform_2(%arg0: i32) -> (i32, i32) {
    %c0_i32 = arith.constant 0 : i32
    %c0_i32_0 = arith.constant 0 : i32
    %c0_i32_1 = arith.constant 0 : i32
    return %c0_i32, %c0_i32_0 : i32, i32
  }
  func.func @transform_3(%arg0: i32) -> (i32, i32) {
    %c0_i32 = arith.constant 0 : i32
    %c0_i32_0 = arith.constant 0 : i32
    return %arg0, %c0_i32 : i32, i32
  }
}

</mosaic_0001>

<llo_original>
// kernel: temporal_pooling_phn.1
$region0: #{temporal_pooling_phn.1}
  #allocation0 [shape = 'u32[]', space=smem, size = 0x4, offset = 0x4, fixed_abs, tag = 'smem constant byte address 0x4 - core index']
  #allocation1 [shape = 'u32[144,128]{1,0:T(1,128)}', space=vmem, size = 0x12000, scoped, tag = 'internal scratch']
  %s0 = inlined_call_operand.vmem [shape: f32[2,3232], index: 0, kind: input, shape index: {}]
  %s1 = inlined_call_operand.vmem [shape: f32[3232,128], index: 1, kind: input, shape index: {}]
  %s2 = inlined_call_operand.vmem [shape: f32[1,128], index: 2, kind: input, shape index: {}]
  %s3 = inlined_call_operand.hbm [shape: f32[2,128], index: 3, kind: output, shape index: {}]
  %s4 = sld [smem:[#allocation0]]
  $region22: #{temporal_pooling_phn.1} parent=0
    _
  %s6 = ssub.s32 1, %s4
  %s7 = scalar_select 0, %s6, %s4
  $region1: #{temporal_pooling_phn.1} parent=0
    #allocation2 [shape = 'u8[1024]{0}', space=vmem, size = 0x400, scoped, tag = 'output window, operand 0, single buffered']
    #allocation3 [shape = 's32[1]{0}', space=sflag, size = 0x4, scoped, tag = 'scoped memory for temporal_pooling_phn.1']
    %8 = vsyncpa [#allocation3], 0
    // Predicated region
    $region2: #{temporal_pooling_phn.1} parent=1 // pred_check
      _
    $region3: #{temporal_pooling_phn.1} parent=1 // pred_check_branch
      %10 = sbr.rel (0) target = $region5
    $region4: #{temporal_pooling_phn.1} parent=1 // pred_region
      _
    $region5: #{temporal_pooling_phn.1} parent=1 // pred_fallthru
      _
    // Predicated region
    $region6: #{temporal_pooling_phn.1} parent=1 // pred_check
      _
    $region7: #{temporal_pooling_phn.1} parent=1 // pred_check_branch
      %12 = sbr.rel (0) target = $region9
    $region8: #{temporal_pooling_phn.1} parent=1 // pred_region
      _
    $region9: #{temporal_pooling_phn.1} parent=1 // pred_fallthru
      _
    // Predicated region
    $region10: #{temporal_pooling_phn.1} parent=1 // pred_check
      _
    $region11: #{temporal_pooling_phn.1} parent=1 // pred_check_branch
      %14 = sbr.rel (0) target = $region13
    $region12: #{temporal_pooling_phn.1} parent=1 // pred_region
      _
    $region13: #{temporal_pooling_phn.1} parent=1 // pred_fallthru
      _
    %v15 = vld [vmem:[%s0] sm:$0xff]
    %v16 = vld [vmem:[%s0 + $0x8] sm:$0xff]
    %v17 = vld [vmem:[%s0 + $0x10] sm:$0xff]
    %v18 = vld [vmem:[%s0 + $0x18] sm:$0xff]
    %v19 = vld [vmem:[%s0 + $0x20] sm:$0xff]
    %v20 = vld [vmem:[%s0 + $0x28] sm:$0xff]
    %v21 = vld [vmem:[%s0 + $0x30] sm:$0xf]
    %v22 = vld [vmem:[%s1] sm:$0xff]
    %v23 = vld [vmem:[%s1 + $0x8] sm:$0xff]
    %v24 = vld [vmem:[%s1 + $0x10] sm:$0xff]
    %v25 = vld [vmem:[%s1 + $0x18] sm:$0xff]
    %v26 = vld [vmem:[%s1 + $0x20] sm:$0xff]
    %v27 = vld [vmem:[%s1 + $0x28] sm:$0xff]
    %v28 = vld [vmem:[%s1 + $0x30] sm:$0xff]
    %v29 = vld [vmem:[%s1 + $0x38] sm:$0xff]
    %v30 = vld [vmem:[%s1 + $0x40] sm:$0xff]
    %v31 = vld [vmem:[%s1 + $0x48] sm:$0xff]
    %v32 = vld [vmem:[%s1 + $0x50] sm:$0xff]
    %v33 = vld [vmem:[%s1 + $0x58] sm:$0xff]
    %v34 = vld [vmem:[%s1 + $0x60] sm:$0xff]
    %v35 = vld [vmem:[%s1 + $0x68] sm:$0xff]
    %v36 = vld [vmem:[%s1 + $0x70] sm:$0xff]
    %v37 = vld [vmem:[%s1 + $0x78] sm:$0xff]
    %v38 = vld [vmem:[%s1 + $0x80] sm:$0xff]
    %v39 = vld [vmem:[%s1 + $0x88] sm:$0xff]
    %v40 = vld [vmem:[%s1 + $0x90] sm:$0xff]
    %v41 = vld [vmem:[%s1 + $0x98] sm:$0xff]
    %v42 = vld [vmem:[%s1 + $0xa0] sm:$0xff]
    %v43 = vld [vmem:[%s1 + $0xa8] sm:$0xff]
    %v44 = vld [vmem:[%s1 + $0xb0] sm:$0xff]
    %v45 = vld [vmem:[%s1 + $0xb8] sm:$0xff]
    %v46 = vld [vmem:[%s1 + $0xc0] sm:$0xff]
    %v47 = vld [vmem:[%s1 + $0xc8] sm:$0xff]
    %v48 = vld [vmem:[%s1 + $0xd0] sm:$0xff]
    %v49 = vld [vmem:[%s1 + $0xd8] sm:$0xff]
    %v50 = vld [vmem:[%s1 + $0xe0] sm:$0xff]
    %v51 = vld [vmem:[%s1 + $0xe8] sm:$0xff]
    %v52 = vld [vmem:[%s1 + $0xf0] sm:$0xff]
    %v53 = vld [vmem:[%s1 + $0xf8] sm:$0xff]
    %v54 = vld [vmem:[%s1 + $0x100] sm:$0xff]
    %v55 = vld [vmem:[%s1 + $0x108] sm:$0xff]
    %v56 = vld [vmem:[%s1 + $0x110] sm:$0xff]
    %v57 = vld [vmem:[%s1 + $0x118] sm:$0xff]
    %v58 = vld [vmem:[%s1 + $0x120] sm:$0xff]
    %v59 = vld [vmem:[%s1 + $0x128] sm:$0xff]
    %v60 = vld [vmem:[%s1 + $0x130] sm:$0xff]
    %v61 = vld [vmem:[%s1 + $0x138] sm:$0xff]
    %v62 = vld [vmem:[%s1 + $0x140] sm:$0xff]
    %v63 = vld [vmem:[%s1 + $0x148] sm:$0xff]
    %v64 = vld [vmem:[%s1 + $0x150] sm:$0xff]
    %v65 = vld [vmem:[%s1 + $0x158] sm:$0xff]
    %v66 = vld [vmem:[%s1 + $0x160] sm:$0xff]
    %v67 = vld [vmem:[%s1 + $0x168] sm:$0xff]
    %v68 = vld [vmem:[%s1 + $0x170] sm:$0xff]
    %v69 = vld [vmem:[%s1 + $0x178] sm:$0xff]
    %v70 = vld [vmem:[%s1 + $0x180] sm:$0xff]
    %v71 = vld [vmem:[%s1 + $0x188] sm:$0xff]
    %v72 = vld [vmem:[%s1 + $0x190] sm:$0xff]
    %v73 = vld [vmem:[%s1 + $0x198] sm:$0xff]
    %v74 = vld [vmem:[%s1 + $0x1a0] sm:$0xff]
    %v75 = vld [vmem:[%s1 + $0x1a8] sm:$0xff]
    %v76 = vld [vmem:[%s1 + $0x1b0] sm:$0xff]
    %v77 = vld [vmem:[%s1 + $0x1b8] sm:$0xff]
    %v78 = vld [vmem:[%s1 + $0x1c0] sm:$0xff]
    %v79 = vld [vmem:[%s1 + $0x1c8] sm:$0xff]
    %v80 = vld [vmem:[%s1 + $0x1d0] sm:$0xff]
    %v81 = vld [vmem:[%s1 + $0x1d8] sm:$0xff]
    %v82 = vld [vmem:[%s1 + $0x1e0] sm:$0xff]
    %v83 = vld [vmem:[%s1 + $0x1e8] sm:$0xff]
    %v84 = vld [vmem:[%s1 + $0x1f0] sm:$0xff]
    %v85 = vld [vmem:[%s1 + $0x1f8] sm:$0xff]
    %v86 = vld [vmem:[%s1 + $0x200] sm:$0xff]
    %v87 = vld [vmem:[%s1 + $0x208] sm:$0xff]
    %v88 = vld [vmem:[%s1 + $0x210] sm:$0xff]
    %v89 = vld [vmem:[%s1 + $0x218] sm:$0xff]
    %v90 = vld [vmem:[%s1 + $0x220] sm:$0xff]
    %v91 = vld [vmem:[%s1 + $0x228] sm:$0xff]
    %v92 = vld [vmem:[%s1 + $0x230] sm:$0xff]
    %v93 = vld [vmem:[%s1 + $0x238] sm:$0xff]
    %v94 = vld [vmem:[%s1 + $0x240] sm:$0xff]
    %v95 = vld [vmem:[%s1 + $0x248] sm:$0xff]
    %v96 = vld [vmem:[%s1 + $0x250] sm:$0xff]
    %v97 = vld [vmem:[%s1 + $0x258] sm:$0xff]
    %v98 = vld [vmem:[%s1 + $0x260] sm:$0xff]
    %v99 = vld [vmem:[%s1 + $0x268] sm:$0xff]
    %v100 = vld [vmem:[%s1 + $0x270] sm:$0xff]
    %v101 = vld [vmem:[%s1 + $0x278] sm:$0xff]
    %v102 = vld [vmem:[%s1 + $0x280] sm:$0xff]
    %v103 = vld [vmem:[%s1 + $0x288] sm:$0xff]
    %v104 = vld [vmem:[%s1 + $0x290] sm:$0xff]
    %v105 = vld [vmem:[%s1 + $0x298] sm:$0xff]
    %v106 = vld [vmem:[%s1 + $0x2a0] sm:$0xff]
    %v107 = vld [vmem:[%s1 + $0x2a8] sm:$0xff]
    %v108 = vld [vmem:[%s1 + $0x2b0] sm:$0xff]
    %v109 = vld [vmem:[%s1 + $0x2b8] sm:$0xff]
    %v110 = vld [vmem:[%s1 + $0x2c0] sm:$0xff]
    %v111 = vld [vmem:[%s1 + $0x2c8] sm:$0xff]
    %v112 = vld [vmem:[%s1 + $0x2d0] sm:$0xff]
    %v113 = vld [vmem:[%s1 + $0x2d8] sm:$0xff]
    %v114 = vld [vmem:[%s1 + $0x2e0] sm:$0xff]
    %v115 = vld [vmem:[%s1 + $0x2e8] sm:$0xff]
    %v116 = vld [vmem:[%s1 + $0x2f0] sm:$0xff]
    %v117 = vld [vmem:[%s1 + $0x2f8] sm:$0xff]
    %v118 = vld [vmem:[%s1 + $0x300] sm:$0xff]
    %v119 = vld [vmem:[%s1 + $0x308] sm:$0xff]
    %v120 = vld [vmem:[%s1 + $0x310] sm:$0xff]
    %v121 = vld [vmem:[%s1 + $0x318] sm:$0xff]
    %v122 = vld [vmem:[%s1 + $0x320] sm:$0xff]
    %v123 = vld [vmem:[%s1 + $0x328] sm:$0xff]
    %v124 = vld [vmem:[%s1 + $0x330] sm:$0xff]
    %v125 = vld [vmem:[%s1 + $0x338] sm:$0xff]
    %v126 = vld [vmem:[%s1 + $0x340] sm:$0xff]
    %v127 = vld [vmem:[%s1 + $0x348] sm:$0xff]
    %v128 = vld [vmem:[%s1 + $0x350] sm:$0xff]
    %v129 = vld [vmem:[%s1 + $0x358] sm:$0xff]
    %v130 = vld [vmem:[%s1 + $0x360] sm:$0xff]
    %v131 = vld [vmem:[%s1 + $0x368] sm:$0xff]
    %v132 = vld [vmem:[%s1 + $0x370] sm:$0xff]
    %v133 = vld [vmem:[%s1 + $0x378] sm:$0xff]
    %v134 = vld [vmem:[%s1 + $0x380] sm:$0xff]
    %v135 = vld [vmem:[%s1 + $0x388] sm:$0xff]
    %v136 = vld [vmem:[%s1 + $0x390] sm:$0xff]
    %v137 = vld [vmem:[%s1 + $0x398] sm:$0xff]
    %v138 = vld [vmem:[%s1 + $0x3a0] sm:$0xff]
    %v139 = vld [vmem:[%s1 + $0x3a8] sm:$0xff]
    %v140 = vld [vmem:[%s1 + $0x3b0] sm:$0xff]
    %v141 = vld [vmem:[%s1 + $0x3b8] sm:$0xff]
    %v142 = vld [vmem:[%s1 + $0x3c0] sm:$0xff]
    %v143 = vld [vmem:[%s1 + $0x3c8] sm:$0xff]
    %v144 = vld [vmem:[%s1 + $0x3d0] sm:$0xff]
    %v145 = vld [vmem:[%s1 + $0x3d8] sm:$0xff]
    %v146 = vld [vmem:[%s1 + $0x3e0] sm:$0xff]
    %v147 = vld [vmem:[%s1 + $0x3e8] sm:$0xff]
    %v148 = vld [vmem:[%s1 + $0x3f0] sm:$0xff]
    %v149 = vld [vmem:[%s1 + $0x3f8] sm:$0xff]
    %v150 = vld [vmem:[%s1 + $0x400] sm:$0xff]
    %v151 = vld [vmem:[%s1 + $0x408] sm:$0xff]
    %v152 = vld [vmem:[%s1 + $0x410] sm:$0xff]
    %v153 = vld [vmem:[%s1 + $0x418] sm:$0xff]
    %v154 = vld [vmem:[%s1 + $0x420] sm:$0xff]
    %v155 = vld [vmem:[%s1 + $0x428] sm:$0xff]
    %v156 = vld [vmem:[%s1 + $0x430] sm:$0xff]
    %v157 = vld [vmem:[%s1 + $0x438] sm:$0xff]
    %v158 = vld [vmem:[%s1 + $0x440] sm:$0xff]
    %v159 = vld [vmem:[%s1 + $0x448] sm:$0xff]
    %v160 = vld [vmem:[%s1 + $0x450] sm:$0xff]
    %v161 = vld [vmem:[%s1 + $0x458] sm:$0xff]
    %v162 = vld [vmem:[%s1 + $0x460] sm:$0xff]
    %v163 = vld [vmem:[%s1 + $0x468] sm:$0xff]
    %v164 = vld [vmem:[%s1 + $0x470] sm:$0xff]
    %v165 = vld [vmem:[%s1 + $0x478] sm:$0xff]
    %v166 = vld [vmem:[%s1 + $0x480] sm:$0xff]
    %v167 = vld [vmem:[%s1 + $0x488] sm:$0xff]
    %v168 = vld [vmem:[%s1 + $0x490] sm:$0xff]
    %v169 = vld [vmem:[%s1 + $0x498] sm:$0xff]
    %v170 = vld [vmem:[%s1 + $0x4a0] sm:$0xff]
    %v171 = vld [vmem:[%s1 + $0x4a8] sm:$0xff]
    %v172 = vld [vmem:[%s1 + $0x4b0] sm:$0xff]
    %v173 = vld [vmem:[%s1 + $0x4b8] sm:$0xff]
    %v174 = vld [vmem:[%s1 + $0x4c0] sm:$0xff]
    %v175 = vld [vmem:[%s1 + $0x4c8] sm:$0xff]
    %v176 = vld [vmem:[%s1 + $0x4d0] sm:$0xff]
    %v177 = vld [vmem:[%s1 + $0x4d8] sm:$0xff]
    %v178 = vld [vmem:[%s1 + $0x4e0] sm:$0xff]
    %v179 = vld [vmem:[%s1 + $0x4e8] sm:$0xff]
    %v180 = vld [vmem:[%s1 + $0x4f0] sm:$0xff]
    %v181 = vld [vmem:[%s1 + $0x4f8] sm:$0xff]
    %v182 = vld [vmem:[%s1 + $0x500] sm:$0xff]
    %v183 = vld [vmem:[%s1 + $0x508] sm:$0xff]
    %v184 = vld [vmem:[%s1 + $0x510] sm:$0xff]
    %v185 = vld [vmem:[%s1 + $0x518] sm:$0xff]
    %v186 = vld [vmem:[%s1 + $0x520] sm:$0xff]
    %v187 = vld [vmem:[%s1 + $0x528] sm:$0xff]
    %v188 = vld [vmem:[%s1 + $0x530] sm:$0xff]
    %v189 = vld [vmem:[%s1 + $0x538] sm:$0xff]
    %v190 = vld [vmem:[%s1 + $0x540] sm:$0xff]
    %v191 = vld [vmem:[%s1 + $0x548] sm:$0xff]
    %v192 = vld [vmem:[%s1 + $0x550] sm:$0xff]
    %v193 = vld [vmem:[%s1 + $0x558] sm:$0xff]
    %v194 = vld [vmem:[%s1 + $0x560] sm:$0xff]
    %v195 = vld [vmem:[%s1 + $0x568] sm:$0xff]
    %v196 = vld [vmem:[%s1 + $0x570] sm:$0xff]
    %v197 = vld [vmem:[%s1 + $0x578] sm:$0xff]
    %v198 = vld [vmem:[%s1 + $0x580] sm:$0xff]
    %v199 = vld [vmem:[%s1 + $0x588] sm:$0xff]
    %v200 = vld [vmem:[%s1 + $0x590] sm:$0xff]
    %v201 = vld [vmem:[%s1 + $0x598] sm:$0xff]
    %v202 = vld [vmem:[%s1 + $0x5a0] sm:$0xff]
    %v203 = vld [vmem:[%s1 + $0x5a8] sm:$0xff]
    %v204 = vld [vmem:[%s1 + $0x5b0] sm:$0xff]
    %v205 = vld [vmem:[%s1 + $0x5b8] sm:$0xff]
    %v206 = vld [vmem:[%s1 + $0x5c0] sm:$0xff]
    %v207 = vld [vmem:[%s1 + $0x5c8] sm:$0xff]
    %v208 = vld [vmem:[%s1 + $0x5d0] sm:$0xff]
    %v209 = vld [vmem:[%s1 + $0x5d8] sm:$0xff]
    %v210 = vld [vmem:[%s1 + $0x5e0] sm:$0xff]
    %v211 = vld [vmem:[%s1 + $0x5e8] sm:$0xff]
    %v212 = vld [vmem:[%s1 + $0x5f0] sm:$0xff]
    %v213 = vld [vmem:[%s1 + $0x5f8] sm:$0xff]
    %v214 = vld [vmem:[%s1 + $0x600] sm:$0xff]
    %v215 = vld [vmem:[%s1 + $0x608] sm:$0xff]
    %v216 = vld [vmem:[%s1 + $0x610] sm:$0xff]
    %v217 = vld [vmem:[%s1 + $0x618] sm:$0xff]
    %v218 = vld [vmem:[%s1 + $0x620] sm:$0xff]
    %v219 = vld [vmem:[%s1 + $0x628] sm:$0xff]
    %v220 = vld [vmem:[%s1 + $0x630] sm:$0xff]
    %v221 = vld [vmem:[%s1 + $0x638] sm:$0xff]
    %v222 = vld [vmem:[%s1 + $0x640] sm:$0xff]
    %v223 = vld [vmem:[%s1 + $0x648] sm:$0xff]
    %v224 = vld [vmem:[%s1 + $0x650] sm:$0xff]
    %v225 = vld [vmem:[%s1 + $0x658] sm:$0xff]
    %v226 = vld [vmem:[%s1 + $0x660] sm:$0xff]
    %v227 = vld [vmem:[%s1 + $0x668] sm:$0xff]
    %v228 = vld [vmem:[%s1 + $0x670] sm:$0xff]
    %v229 = vld [vmem:[%s1 + $0x678] sm:$0xff]
    %v230 = vld [vmem:[%s1 + $0x680] sm:$0xff]
    %v231 = vld [vmem:[%s1 + $0x688] sm:$0xff]
    %v232 = vld [vmem:[%s1 + $0x690] sm:$0xff]
    %v233 = vld [vmem:[%s1 + $0x698] sm:$0xff]
    %v234 = vld [vmem:[%s1 + $0x6a0] sm:$0xff]
    %v235 = vld [vmem:[%s1 + $0x6a8] sm:$0xff]
    %v236 = vld [vmem:[%s1 + $0x6b0] sm:$0xff]
    %v237 = vld [vmem:[%s1 + $0x6b8] sm:$0xff]
    %v238 = vld [vmem:[%s1 + $0x6c0] sm:$0xff]
    %v239 = vld [vmem:[%s1 + $0x6c8] sm:$0xff]
    %v240 = vld [vmem:[%s1 + $0x6d0] sm:$0xff]
    %v241 = vld [vmem:[%s1 + $0x6d8] sm:$0xff]
    %v242 = vld [vmem:[%s1 + $0x6e0] sm:$0xff]
    %v243 = vld [vmem:[%s1 + $0x6e8] sm:$0xff]
    %v244 = vld [vmem:[%s1 + $0x6f0] sm:$0xff]
    %v245 = vld [vmem:[%s1 + $0x6f8] sm:$0xff]
    %v246 = vld [vmem:[%s1 + $0x700] sm:$0xff]
    %v247 = vld [vmem:[%s1 + $0x708] sm:$0xff]
    %v248 = vld [vmem:[%s1 + $0x710] sm:$0xff]
    %v249 = vld [vmem:[%s1 + $0x718] sm:$0xff]
    %v250 = vld [vmem:[%s1 + $0x720] sm:$0xff]
    %v251 = vld [vmem:[%s1 + $0x728] sm:$0xff]
    %v252 = vld [vmem:[%s1 + $0x730] sm:$0xff]
    %v253 = vld [vmem:[%s1 + $0x738] sm:$0xff]
    %v254 = vld [vmem:[%s1 + $0x740] sm:$0xff]
    %v255 = vld [vmem:[%s1 + $0x748] sm:$0xff]
    %v256 = vld [vmem:[%s1 + $0x750] sm:$0xff]
    %v257 = vld [vmem:[%s1 + $0x758] sm:$0xff]
    %v258 = vld [vmem:[%s1 + $0x760] sm:$0xff]
    %v259 = vld [vmem:[%s1 + $0x768] sm:$0xff]
    %v260 = vld [vmem:[%s1 + $0x770] sm:$0xff]
    %v261 = vld [vmem:[%s1 + $0x778] sm:$0xff]
    %v262 = vld [vmem:[%s1 + $0x780] sm:$0xff]
    %v263 = vld [vmem:[%s1 + $0x788] sm:$0xff]
    %v264 = vld [vmem:[%s1 + $0x790] sm:$0xff]
    %v265 = vld [vmem:[%s1 + $0x798] sm:$0xff]
    %v266 = vld [vmem:[%s1 + $0x7a0] sm:$0xff]
    %v267 = vld [vmem:[%s1 + $0x7a8] sm:$0xff]
    %v268 = vld [vmem:[%s1 + $0x7b0] sm:$0xff]
    %v269 = vld [vmem:[%s1 + $0x7b8] sm:$0xff]
    %v270 = vld [vmem:[%s1 + $0x7c0] sm:$0xff]
    %v271 = vld [vmem:[%s1 + $0x7c8] sm:$0xff]
    %v272 = vld [vmem:[%s1 + $0x7d0] sm:$0xff]
    %v273 = vld [vmem:[%s1 + $0x7d8] sm:$0xff]
    %v274 = vld [vmem:[%s1 + $0x7e0] sm:$0xff]
    %v275 = vld [vmem:[%s1 + $0x7e8] sm:$0xff]
    %v276 = vld [vmem:[%s1 + $0x7f0] sm:$0xff]
    %v277 = vld [vmem:[%s1 + $0x7f8] sm:$0xff]
    %v278 = vld [vmem:[%s1 + $0x800] sm:$0xff]
    %v279 = vld [vmem:[%s1 + $0x808] sm:$0xff]
    %v280 = vld [vmem:[%s1 + $0x810] sm:$0xff]
    %v281 = vld [vmem:[%s1 + $0x818] sm:$0xff]
    %v282 = vld [vmem:[%s1 + $0x820] sm:$0xff]
    %v283 = vld [vmem:[%s1 + $0x828] sm:$0xff]
    %v284 = vld [vmem:[%s1 + $0x830] sm:$0xff]
    %v285 = vld [vmem:[%s1 + $0x838] sm:$0xff]
    %v286 = vld [vmem:[%s1 + $0x840] sm:$0xff]
    %v287 = vld [vmem:[%s1 + $0x848] sm:$0xff]
    %v288 = vld [vmem:[%s1 + $0x850] sm:$0xff]
    %v289 = vld [vmem:[%s1 + $0x858] sm:$0xff]
    %v290 = vld [vmem:[%s1 + $0x860] sm:$0xff]
    %v291 = vld [vmem:[%s1 + $0x868] sm:$0xff]
    %v292 = vld [vmem:[%s1 + $0x870] sm:$0xff]
    %v293 = vld [vmem:[%s1 + $0x878] sm:$0xff]
    %v294 = vld [vmem:[%s1 + $0x880] sm:$0xff]
    %v295 = vld [vmem:[%s1 + $0x888] sm:$0xff]
    %v296 = vld [vmem:[%s1 + $0x890] sm:$0xff]
    %v297 = vld [vmem:[%s1 + $0x898] sm:$0xff]
    %v298 = vld [vmem:[%s1 + $0x8a0] sm:$0xff]
    %v299 = vld [vmem:[%s1 + $0x8a8] sm:$0xff]
    %v300 = vld [vmem:[%s1 + $0x8b0] sm:$0xff]
    %v301 = vld [vmem:[%s1 + $0x8b8] sm:$0xff]
    %v302 = vld [vmem:[%s1 + $0x8c0] sm:$0xff]
    %v303 = vld [vmem:[%s1 + $0x8c8] sm:$0xff]
    %v304 = vld [vmem:[%s1 + $0x8d0] sm:$0xff]
    %v305 = vld [vmem:[%s1 + $0x8d8] sm:$0xff]
    %v306 = vld [vmem:[%s1 + $0x8e0] sm:$0xff]
    %v307 = vld [vmem:[%s1 + $0x8e8] sm:$0xff]
    %v308 = vld [vmem:[%s1 + $0x8f0] sm:$0xff]
    %v309 = vld [vmem:[%s1 + $0x8f8] sm:$0xff]
    %v310 = vld [vmem:[%s1 + $0x900] sm:$0xff]
    %v311 = vld [vmem:[%s1 + $0x908] sm:$0xff]
    %v312 = vld [vmem:[%s1 + $0x910] sm:$0xff]
    %v313 = vld [vmem:[%s1 + $0x918] sm:$0xff]
    %v314 = vld [vmem:[%s1 + $0x920] sm:$0xff]
    %v315 = vld [vmem:[%s1 + $0x928] sm:$0xff]
    %v316 = vld [vmem:[%s1 + $0x930] sm:$0xff]
    %v317 = vld [vmem:[%s1 + $0x938] sm:$0xff]
    %v318 = vld [vmem:[%s1 + $0x940] sm:$0xff]
    %v319 = vld [vmem:[%s1 + $0x948] sm:$0xff]
    %v320 = vld [vmem:[%s1 + $0x950] sm:$0xff]
    %v321 = vld [vmem:[%s1 + $0x958] sm:$0xff]
    %v322 = vld [vmem:[%s1 + $0x960] sm:$0xff]
    %v323 = vld [vmem:[%s1 + $0x968] sm:$0xff]
    %v324 = vld [vmem:[%s1 + $0x970] sm:$0xff]
    %v325 = vld [vmem:[%s1 + $0x978] sm:$0xff]
    %v326 = vld [vmem:[%s1 + $0x980] sm:$0xff]
    %v327 = vld [vmem:[%s1 + $0x988] sm:$0xff]
    %v328 = vld [vmem:[%s1 + $0x990] sm:$0xff]
    %v329 = vld [vmem:[%s1 + $0x998] sm:$0xff]
    %v330 = vld [vmem:[%s1 + $0x9a0] sm:$0xff]
    %v331 = vld [vmem:[%s1 + $0x9a8] sm:$0xff]
    %v332 = vld [vmem:[%s1 + $0x9b0] sm:$0xff]
    %v333 = vld [vmem:[%s1 + $0x9b8] sm:$0xff]
    %v334 = vld [vmem:[%s1 + $0x9c0] sm:$0xff]
    %v335 = vld [vmem:[%s1 + $0x9c8] sm:$0xff]
    %v336 = vld [vmem:[%s1 + $0x9d0] sm:$0xff]
    %v337 = vld [vmem:[%s1 + $0x9d8] sm:$0xff]
    %v338 = vld [vmem:[%s1 + $0x9e0] sm:$0xff]
    %v339 = vld [vmem:[%s1 + $0x9e8] sm:$0xff]
    %v340 = vld [vmem:[%s1 + $0x9f0] sm:$0xff]
    %v341 = vld [vmem:[%s1 + $0x9f8] sm:$0xff]
    %v342 = vld [vmem:[%s1 + $0xa00] sm:$0xff]
    %v343 = vld [vmem:[%s1 + $0xa08] sm:$0xff]
    %v344 = vld [vmem:[%s1 + $0xa10] sm:$0xff]
    %v345 = vld [vmem:[%s1 + $0xa18] sm:$0xff]
    %v346 = vld [vmem:[%s1 + $0xa20] sm:$0xff]
    %v347 = vld [vmem:[%s1 + $0xa28] sm:$0xff]
    %v348 = vld [vmem:[%s1 + $0xa30] sm:$0xff]
    %v349 = vld [vmem:[%s1 + $0xa38] sm:$0xff]
    %v350 = vld [vmem:[%s1 + $0xa40] sm:$0xff]
    %v351 = vld [vmem:[%s1 + $0xa48] sm:$0xff]
    %v352 = vld [vmem:[%s1 + $0xa50] sm:$0xff]
    %v353 = vld [vmem:[%s1 + $0xa58] sm:$0xff]
    %v354 = vld [vmem:[%s1 + $0xa60] sm:$0xff]
    %v355 = vld [vmem:[%s1 + $0xa68] sm:$0xff]
    %v356 = vld [vmem:[%s1 + $0xa70] sm:$0xff]
    %v357 = vld [vmem:[%s1 + $0xa78] sm:$0xff]
    %v358 = vld [vmem:[%s1 + $0xa80] sm:$0xff]
    %v359 = vld [vmem:[%s1 + $0xa88] sm:$0xff]
    %v360 = vld [vmem:[%s1 + $0xa90] sm:$0xff]
    %v361 = vld [vmem:[%s1 + $0xa98] sm:$0xff]
    %v362 = vld [vmem:[%s1 + $0xaa0] sm:$0xff]
    %v363 = vld [vmem:[%s1 + $0xaa8] sm:$0xff]
    %v364 = vld [vmem:[%s1 + $0xab0] sm:$0xff]
    %v365 = vld [vmem:[%s1 + $0xab8] sm:$0xff]
    %v366 = vld [vmem:[%s1 + $0xac0] sm:$0xff]
    %v367 = vld [vmem:[%s1 + $0xac8] sm:$0xff]
    %v368 = vld [vmem:[%s1 + $0xad0] sm:$0xff]
    %v369 = vld [vmem:[%s1 + $0xad8] sm:$0xff]
    %v370 = vld [vmem:[%s1 + $0xae0] sm:$0xff]
    %v371 = vld [vmem:[%s1 + $0xae8] sm:$0xff]
    %v372 = vld [vmem:[%s1 + $0xaf0] sm:$0xff]
    %v373 = vld [vmem:[%s1 + $0xaf8] sm:$0xff]
    %v374 = vld [vmem:[%s1 + $0xb00] sm:$0xff]
    %v375 = vld [vmem:[%s1 + $0xb08] sm:$0xff]
    %v376 = vld [vmem:[%s1 + $0xb10] sm:$0xff]
    %v377 = vld [vmem:[%s1 + $0xb18] sm:$0xff]
    %v378 = vld [vmem:[%s1 + $0xb20] sm:$0xff]
    %v379 = vld [vmem:[%s1 + $0xb28] sm:$0xff]
    %v380 = vld [vmem:[%s1 + $0xb30] sm:$0xff]
    %v381 = vld [vmem:[%s1 + $0xb38] sm:$0xff]
    %v382 = vld [vmem:[%s1 + $0xb40] sm:$0xff]
    %v383 = vld [vmem:[%s1 + $0xb48] sm:$0xff]
    %v384 = vld [vmem:[%s1 + $0xb50] sm:$0xff]
    %v385 = vld [vmem:[%s1 + $0xb58] sm:$0xff]
    %v386 = vld [vmem:[%s1 + $0xb60] sm:$0xff]
    %v387 = vld [vmem:[%s1 + $0xb68] sm:$0xff]
    %v388 = vld [vmem:[%s1 + $0xb70] sm:$0xff]
    %v389 = vld [vmem:[%s1 + $0xb78] sm:$0xff]
    %v390 = vld [vmem:[%s1 + $0xb80] sm:$0xff]
    %v391 = vld [vmem:[%s1 + $0xb88] sm:$0xff]
    %v392 = vld [vmem:[%s1 + $0xb90] sm:$0xff]
    %v393 = vld [vmem:[%s1 + $0xb98] sm:$0xff]
    %v394 = vld [vmem:[%s1 + $0xba0] sm:$0xff]
    %v395 = vld [vmem:[%s1 + $0xba8] sm:$0xff]
    %v396 = vld [vmem:[%s1 + $0xbb0] sm:$0xff]
    %v397 = vld [vmem:[%s1 + $0xbb8] sm:$0xff]
    %v398 = vld [vmem:[%s1 + $0xbc0] sm:$0xff]
    %v399 = vld [vmem:[%s1 + $0xbc8] sm:$0xff]
    %v400 = vld [vmem:[%s1 + $0xbd0] sm:$0xff]
    %v401 = vld [vmem:[%s1 + $0xbd8] sm:$0xff]
    %v402 = vld [vmem:[%s1 + $0xbe0] sm:$0xff]
    %v403 = vld [vmem:[%s1 + $0xbe8] sm:$0xff]
    %v404 = vld [vmem:[%s1 + $0xbf0] sm:$0xff]
    %v405 = vld [vmem:[%s1 + $0xbf8] sm:$0xff]
    %v406 = vld [vmem:[%s1 + $0xc00] sm:$0xff]
    %v407 = vld [vmem:[%s1 + $0xc08] sm:$0xff]
    %v408 = vld [vmem:[%s1 + $0xc10] sm:$0xff]
    %v409 = vld [vmem:[%s1 + $0xc18] sm:$0xff]
    %v410 = vld [vmem:[%s1 + $0xc20] sm:$0xff]
    %v411 = vld [vmem:[%s1 + $0xc28] sm:$0xff]
    %v412 = vld [vmem:[%s1 + $0xc30] sm:$0xff]
    %v413 = vld [vmem:[%s1 + $0xc38] sm:$0xff]
    %v414 = vld [vmem:[%s1 + $0xc40] sm:$0xff]
    %v415 = vld [vmem:[%s1 + $0xc48] sm:$0xff]
    %v416 = vld [vmem:[%s1 + $0xc50] sm:$0xff]
    %v417 = vld [vmem:[%s1 + $0xc58] sm:$0xff]
    %v418 = vld [vmem:[%s1 + $0xc60] sm:$0xff]
    %v419 = vld [vmem:[%s1 + $0xc68] sm:$0xff]
    %v420 = vld [vmem:[%s1 + $0xc70] sm:$0xff]
    %v421 = vld [vmem:[%s1 + $0xc78] sm:$0xff]
    %v422 = vld [vmem:[%s1 + $0xc80] sm:$0xff]
    %v423 = vld [vmem:[%s1 + $0xc88] sm:$0xff]
    %v424 = vld [vmem:[%s1 + $0xc90] sm:$0xff]
    %v425 = vld [vmem:[%s1 + $0xc98] sm:$0xff]
    %v426 = vld [vmem:[%s2] sm:$0x1]
    %v428 = vlaneseq
    %v429 = vshrl.u32 %v428, 7
    %v430 = vsub.s32 0, %v429
    %v431 = vrot.slane %v426, %v430
    %v440 = vcombine.high %v15, %v15
    %v442 = vunpack.c.l.s4 1983009808
    %v443 = vunpack.c.0.s8 %v442
    %v444 = vlaneseq
    %v445 = vshrl.u32 %v444, 7
    %v446 = vsub.s32 %v443, %v445
    %v447 = vrot.slane %v15, %v446
    %v449 = vunpack.c.l.s4 1983009808
    %v450 = vunpack.c.0.s8 %v449
    %v451 = vlaneseq
    %v452 = vshrl.u32 %v451, 7
    %v453 = vsub.s32 %v450, %v452
    %v454 = vrot.slane %v440, %v453
    %v455 = vcombine.high %v447, %v447
    %v456 = vcombine.high %v454, %v454
    %v457 = vcombine.high %v16, %v16
    %v459 = vunpack.c.l.s4 1983009808
    %v460 = vunpack.c.0.s8 %v459
    %v461 = vlaneseq
    %v462 = vshrl.u32 %v461, 7
    %v463 = vsub.s32 %v460, %v462
    %v464 = vrot.slane %v16, %v463
    %v466 = vunpack.c.l.s4 1983009808
    %v467 = vunpack.c.0.s8 %v466
    %v468 = vlaneseq
    %v469 = vshrl.u32 %v468, 7
    %v470 = vsub.s32 %v467, %v469
    %v471 = vrot.slane %v457, %v470
    %v472 = vcombine.high %v464, %v464
    %v473 = vcombine.high %v471, %v471
    %v474 = vcombine.high %v17, %v17
    %v476 = vunpack.c.l.s4 1983009808
    %v477 = vunpack.c.0.s8 %v476
    %v478 = vlaneseq
    %v479 = vshrl.u32 %v478, 7
    %v480 = vsub.s32 %v477, %v479
    %v481 = vrot.slane %v17, %v480
    %v483 = vunpack.c.l.s4 1983009808
    %v484 = vunpack.c.0.s8 %v483
    %v485 = vlaneseq
    %v486 = vshrl.u32 %v485, 7
    %v487 = vsub.s32 %v484, %v486
    %v488 = vrot.slane %v474, %v487
    %v489 = vcombine.high %v481, %v481
    %v490 = vcombine.high %v488, %v488
    %v491 = vcombine.high %v18, %v18
    %v493 = vunpack.c.l.s4 1983009808
    %v494 = vunpack.c.0.s8 %v493
    %v495 = vlaneseq
    %v496 = vshrl.u32 %v495, 7
    %v497 = vsub.s32 %v494, %v496
    %v498 = vrot.slane %v18, %v497
    %v500 = vunpack.c.l.s4 1983009808
    %v501 = vunpack.c.0.s8 %v500
    %v502 = vlaneseq
    %v503 = vshrl.u32 %v502, 7
    %v504 = vsub.s32 %v501, %v503
    %v505 = vrot.slane %v491, %v504
    %v506 = vcombine.high %v498, %v498
    %v507 = vcombine.high %v505, %v505
    %v508 = vcombine.high %v19, %v19
    %v510 = vunpack.c.l.s4 1983009808
    %v511 = vunpack.c.0.s8 %v510
    %v512 = vlaneseq
    %v513 = vshrl.u32 %v512, 7
    %v514 = vsub.s32 %v511, %v513
    %v515 = vrot.slane %v19, %v514
    %v517 = vunpack.c.l.s4 1983009808
    %v518 = vunpack.c.0.s8 %v517
    %v519 = vlaneseq
    %v520 = vshrl.u32 %v519, 7
    %v521 = vsub.s32 %v518, %v520
    %v522 = vrot.slane %v508, %v521
    %v523 = vcombine.high %v515, %v515
    %v524 = vcombine.high %v522, %v522
    %v525 = vcombine.high %v20, %v20
    %v527 = vunpack.c.l.s4 1983009808
    %v528 = vunpack.c.0.s8 %v527
    %v529 = vlaneseq
    %v530 = vshrl.u32 %v529, 7
    %v531 = vsub.s32 %v528, %v530
    %v532 = vrot.slane %v20, %v531
    %v534 = vunpack.c.l.s4 1983009808
    %v535 = vunpack.c.0.s8 %v534
    %v536 = vlaneseq
    %v537 = vshrl.u32 %v536, 7
    %v538 = vsub.s32 %v535, %v537
    %v539 = vrot.slane %v525, %v538
    %v540 = vcombine.high %v532, %v532
    %v541 = vcombine.high %v539, %v539
    %v543 = vunpack.c.l.s4 1983009808
    %v544 = vunpack.c.0.s8 %v543
    %v545 = vlaneseq
    %v546 = vshrl.u32 %v545, 7
    %v547 = vsub.s32 %v544, %v546
    %v548 = vrot.slane %v21, %v547
    %v549 = vcombine.high %v548, %v548
    %vm575 = vcmask 261120
    %v576 = vsel %vm575, %v549, 0
    %578 = vmatprep.subr.mxu0 0.0
    %579 = vmatpush1.msra.mxu0 %v22
    %580 = vmatprep.subr.mxu0 0.0
    %581 = vmatpush1.msra.mxu0 %v23
    %582 = vmatprep.subr.mxu0 0.0
    %583 = vmatpush1.msra.mxu0 %v24
    %584 = vmatprep.subr.mxu0 0.0
    %585 = vmatpush1.msra.mxu0 %v25
    %586 = vmatprep.subr.mxu0 0.0
    %587 = vmatpush1.msra.mxu0 %v26
    %588 = vmatprep.subr.mxu0 0.0
    %589 = vmatpush1.msra.mxu0 %v27
    %590 = vmatprep.subr.mxu0 0.0
    %591 = vmatpush1.msra.mxu0 %v28
    %592 = vmatprep.subr.mxu0 0.0
    %593 = vmatpush1.msra.mxu0 %v29
    %594 = vmatprep.subr.mxu0 0.0
    %595 = vmatpush1.msra.mxu0 %v30
    %596 = vmatprep.subr.mxu0 0.0
    %597 = vmatpush1.msra.mxu0 %v31
    %598 = vmatprep.subr.mxu0 0.0
    %599 = vmatpush1.msra.mxu0 %v32
    %600 = vmatprep.subr.mxu0 0.0
    %601 = vmatpush1.msra.mxu0 %v33
    %602 = vmatprep.subr.mxu0 0.0
    %603 = vmatpush1.msra.mxu0 %v34
    %604 = vmatprep.subr.mxu0 0.0
    %605 = vmatpush1.msra.mxu0 %v35
    %606 = vmatprep.subr.mxu0 0.0
    %607 = vmatpush1.msra.mxu0 %v36
    %608 = vmatprep.subr.mxu0 0.0
    %609 = vmatpush1.msra.mxu0 %v37
    %610 = vmatprep.subr.mxu0 0.0
    %611 = vmatpush1.msra.mxu0 %v38
    %612 = vmatprep.subr.mxu0 0.0
    %613 = vmatpush1.msra.mxu0 %v39
    %614 = vmatprep.subr.mxu0 0.0
    %615 = vmatpush1.msra.mxu0 %v40
    %616 = vmatprep.subr.mxu0 0.0
    %617 = vmatpush1.msra.mxu0 %v41
    %618 = vmatprep.subr.mxu0 0.0
    %619 = vmatpush1.msra.mxu0 %v42
    %620 = vmatprep.subr.mxu0 0.0
    %621 = vmatpush1.msra.mxu0 %v43
    %622 = vmatprep.subr.mxu0 0.0
    %623 = vmatpush1.msra.mxu0 %v44
    %624 = vmatprep.subr.mxu0 0.0
    %625 = vmatpush1.msra.mxu0 %v45
    %626 = vmatprep.subr.mxu0 0.0
    %627 = vmatpush1.msra.mxu0 %v46
    %628 = vmatprep.subr.mxu0 0.0
    %629 = vmatpush1.msra.mxu0 %v47
    %630 = vmatprep.subr.mxu0 0.0
    %631 = vmatpush1.msra.mxu0 %v48
    %632 = vmatprep.subr.mxu0 0.0
    %633 = vmatpush1.msra.mxu0 %v49
    %634 = vmatprep.subr.mxu0 0.0
    %635 = vmatpush1.msra.mxu0 %v50
    %636 = vmatprep.subr.mxu0 0.0
    %637 = vmatpush1.msra.mxu0 %v51
    %638 = vmatprep.subr.mxu0 0.0
    %639 = vmatpush1.msra.mxu0 %v52
    %640 = vmatprep.subr.mxu0 0.0
    %641 = vmatpush1.msra.mxu0 %v53
    %642 = vmatprep.mubr.f32.mxu0 %v455
    %643 = vmatmul.mubr.f32.gmra.mrb[0].mxu0 %v447
    %v644 = vpop.f32.mrb[0].mxu0
    %v645 = vadd.f32 %v431, %v644
    %v646 = vpop.f32.mrb[0].mxu0
    %647 = vdwg.mxu0
    %648 = vmatprep.subr.mxu0 0.0
    %649 = vmatpush1.msra.mxu0 %v54
    %650 = vmatprep.subr.mxu0 0.0
    %651 = vmatpush1.msra.mxu0 %v55
    %652 = vmatprep.subr.mxu0 0.0
    %653 = vmatpush1.msra.mxu0 %v56
    %654 = vmatprep.subr.mxu0 0.0
    %655 = vmatpush1.msra.mxu0 %v57
    %656 = vmatprep.subr.mxu0 0.0
    %657 = vmatpush1.msra.mxu0 %v58
    %658 = vmatprep.subr.mxu0 0.0
    %659 = vmatpush1.msra.mxu0 %v59
    %660 = vmatprep.subr.mxu0 0.0
    %661 = vmatpush1.msra.mxu0 %v60
    %662 = vmatprep.subr.mxu0 0.0
    %663 = vmatpush1.msra.mxu0 %v61
    %664 = vmatprep.subr.mxu0 0.0
    %665 = vmatpush1.msra.mxu0 %v62
    %666 = vmatprep.subr.mxu0 0.0
    %667 = vmatpush1.msra.mxu0 %v63
    %668 = vmatprep.subr.mxu0 0.0
    %669 = vmatpush1.msra.mxu0 %v64
    %670 = vmatprep.subr.mxu0 0.0
    %671 = vmatpush1.msra.mxu0 %v65
    %672 = vmatprep.subr.mxu0 0.0
    %673 = vmatpush1.msra.mxu0 %v66
    %674 = vmatprep.subr.mxu0 0.0
    %675 = vmatpush1.msra.mxu0 %v67
    %676 = vmatprep.subr.mxu0 0.0
    %677 = vmatpush1.msra.mxu0 %v68
    %678 = vmatprep.subr.mxu0 0.0
    %679 = vmatpush1.msra.mxu0 %v69
    %680 = vmatprep.subr.mxu0 0.0
    %681 = vmatpush1.msra.mxu0 %v70
    %682 = vmatprep.subr.mxu0 0.0
    %683 = vmatpush1.msra.mxu0 %v71
    %684 = vmatprep.subr.mxu0 0.0
    %685 = vmatpush1.msra.mxu0 %v72
    %686 = vmatprep.subr.mxu0 0.0
    %687 = vmatpush1.msra.mxu0 %v73
    %688 = vmatprep.subr.mxu0 0.0
    %689 = vmatpush1.msra.mxu0 %v74
    %690 = vmatprep.subr.mxu0 0.0
    %691 = vmatpush1.msra.mxu0 %v75
    %692 = vmatprep.subr.mxu0 0.0
    %693 = vmatpush1.msra.mxu0 %v76
    %694 = vmatprep.subr.mxu0 0.0
    %695 = vmatpush1.msra.mxu0 %v77
    %696 = vmatprep.subr.mxu0 0.0
    %697 = vmatpush1.msra.mxu0 %v78
    %698 = vmatprep.subr.mxu0 0.0
    %699 = vmatpush1.msra.mxu0 %v79
    %700 = vmatprep.subr.mxu0 0.0
    %701 = vmatpush1.msra.mxu0 %v80
    %702 = vmatprep.subr.mxu0 0.0
    %703 = vmatpush1.msra.mxu0 %v81
    %704 = vmatprep.subr.mxu0 0.0
    %705 = vmatpush1.msra.mxu0 %v82
    %706 = vmatprep.subr.mxu0 0.0
    %707 = vmatpush1.msra.mxu0 %v83
    %708 = vmatprep.subr.mxu0 0.0
    %709 = vmatpush1.msra.mxu0 %v84
    %710 = vmatprep.subr.mxu0 0.0
    %711 = vmatpush1.msra.mxu0 %v85
    %712 = vmatprep.mubr.f32.mxu0 %v456
    %713 = vmatmul.mubr.f32.gmra.mrb[0].mxu0 %v454
    %v714 = vpop.f32.mrb[0].mxu0
    %v715 = vadd.f32 %v645, %v714
    %v716 = vpop.f32.mrb[0].mxu0
    %717 = vdwg.mxu0
    %718 = vmatprep.subr.mxu0 0.0
    %719 = vmatpush1.msra.mxu0 %v86
    %720 = vmatprep.subr.mxu0 0.0
    %721 = vmatpush1.msra.mxu0 %v87
    %722 = vmatprep.subr.mxu0 0.0
    %723 = vmatpush1.msra.mxu0 %v88
    %724 = vmatprep.subr.mxu0 0.0
    %725 = vmatpush1.msra.mxu0 %v89
    %726 = vmatprep.subr.mxu0 0.0
    %727 = vmatpush1.msra.mxu0 %v90
    %728 = vmatprep.subr.mxu0 0.0
    %729 = vmatpush1.msra.mxu0 %v91
    %730 = vmatprep.subr.mxu0 0.0
    %731 = vmatpush1.msra.mxu0 %v92
    %732 = vmatprep.subr.mxu0 0.0
    %733 = vmatpush1.msra.mxu0 %v93
    %734 = vmatprep.subr.mxu0 0.0
    %735 = vmatpush1.msra.mxu0 %v94
    %736 = vmatprep.subr.mxu0 0.0
    %737 = vmatpush1.msra.mxu0 %v95
    %738 = vmatprep.subr.mxu0 0.0
    %739 = vmatpush1.msra.mxu0 %v96
    %740 = vmatprep.subr.mxu0 0.0
    %741 = vmatpush1.msra.mxu0 %v97
    %742 = vmatprep.subr.mxu0 0.0
    %743 = vmatpush1.msra.mxu0 %v98
    %744 = vmatprep.subr.mxu0 0.0
    %745 = vmatpush1.msra.mxu0 %v99
    %746 = vmatprep.subr.mxu0 0.0
    %747 = vmatpush1.msra.mxu0 %v100
    %748 = vmatprep.subr.mxu0 0.0
    %749 = vmatpush1.msra.mxu0 %v101
    %750 = vmatprep.subr.mxu0 0.0
    %751 = vmatpush1.msra.mxu0 %v102
    %752 = vmatprep.subr.mxu0 0.0
    %753 = vmatpush1.msra.mxu0 %v103
    %754 = vmatprep.subr.mxu0 0.0
    %755 = vmatpush1.msra.mxu0 %v104
    %756 = vmatprep.subr.mxu0 0.0
    %757 = vmatpush1.msra.mxu0 %v105
    %758 = vmatprep.subr.mxu0 0.0
    %759 = vmatpush1.msra.mxu0 %v106
    %760 = vmatprep.subr.mxu0 0.0
    %761 = vmatpush1.msra.mxu0 %v107
    %762 = vmatprep.subr.mxu0 0.0
    %763 = vmatpush1.msra.mxu0 %v108
    %764 = vmatprep.subr.mxu0 0.0
    %765 = vmatpush1.msra.mxu0 %v109
    %766 = vmatprep.subr.mxu0 0.0
    %767 = vmatpush1.msra.mxu0 %v110
    %768 = vmatprep.subr.mxu0 0.0
    %769 = vmatpush1.msra.mxu0 %v111
    %770 = vmatprep.subr.mxu0 0.0
    %771 = vmatpush1.msra.mxu0 %v112
    %772 = vmatprep.subr.mxu0 0.0
    %773 = vmatpush1.msra.mxu0 %v113
    %774 = vmatprep.subr.mxu0 0.0
    %775 = vmatpush1.msra.mxu0 %v114
    %776 = vmatprep.subr.mxu0 0.0
    %777 = vmatpush1.msra.mxu0 %v115
    %778 = vmatprep.subr.mxu0 0.0
    %779 = vmatpush1.msra.mxu0 %v116
    %780 = vmatprep.subr.mxu0 0.0
    %781 = vmatpush1.msra.mxu0 %v117
    %782 = vmatprep.mubr.f32.mxu0 %v472
    %783 = vmatmul.mubr.f32.gmra.mrb[0].mxu0 %v464
    %v784 = vpop.f32.mrb[0].mxu0
    %v785 = vadd.f32 %v715, %v784
    %v786 = vpop.f32.mrb[0].mxu0
    %787 = vdwg.mxu0
    %788 = vmatprep.subr.mxu0 0.0
    %789 = vmatpush1.msra.mxu0 %v118
    %790 = vmatprep.subr.mxu0 0.0
    %791 = vmatpush1.msra.mxu0 %v119
    %792 = vmatprep.subr.mxu0 0.0
    %793 = vmatpush1.msra.mxu0 %v120
    %794 = vmatprep.subr.mxu0 0.0
    %795 = vmatpush1.msra.mxu0 %v121
    %796 = vmatprep.subr.mxu0 0.0
    %797 = vmatpush1.msra.mxu0 %v122
    %798 = vmatprep.subr.mxu0 0.0
    %799 = vmatpush1.msra.mxu0 %v123
    %800 = vmatprep.subr.mxu0 0.0
    %801 = vmatpush1.msra.mxu0 %v124
    %802 = vmatprep.subr.mxu0 0.0
    %803 = vmatpush1.msra.mxu0 %v125
    %804 = vmatprep.subr.mxu0 0.0
    %805 = vmatpush1.msra.mxu0 %v126
    %806 = vmatprep.subr.mxu0 0.0
    %807 = vmatpush1.msra.mxu0 %v127
    %808 = vmatprep.subr.mxu0 0.0
    %809 = vmatpush1.msra.mxu0 %v128
    %810 = vmatprep.subr.mxu0 0.0
    %811 = vmatpush1.msra.mxu0 %v129
    %812 = vmatprep.subr.mxu0 0.0
    %813 = vmatpush1.msra.mxu0 %v130
    %814 = vmatprep.subr.mxu0 0.0
    %815 = vmatpush1.msra.mxu0 %v131
    %816 = vmatprep.subr.mxu0 0.0
    %817 = vmatpush1.msra.mxu0 %v132
    %818 = vmatprep.subr.mxu0 0.0
    %819 = vmatpush1.msra.mxu0 %v133
    %820 = vmatprep.subr.mxu0 0.0
    %821 = vmatpush1.msra.mxu0 %v134
    %822 = vmatprep.subr.mxu0 0.0
    %823 = vmatpush1.msra.mxu0 %v135
    %824 = vmatprep.subr.mxu0 0.0
    %825 = vmatpush1.msra.mxu0 %v136
    %826 = vmatprep.subr.mxu0 0.0
    %827 = vmatpush1.msra.mxu0 %v137
    %828 = vmatprep.subr.mxu0 0.0
    %829 = vmatpush1.msra.mxu0 %v138
    %830 = vmatprep.subr.mxu0 0.0
    %831 = vmatpush1.msra.mxu0 %v139
    %832 = vmatprep.subr.mxu0 0.0
    %833 = vmatpush1.msra.mxu0 %v140
    %834 = vmatprep.subr.mxu0 0.0
    %835 = vmatpush1.msra.mxu0 %v141
    %836 = vmatprep.subr.mxu0 0.0
    %837 = vmatpush1.msra.mxu0 %v142
    %838 = vmatprep.subr.mxu0 0.0
    %839 = vmatpush1.msra.mxu0 %v143
    %840 = vmatprep.subr.mxu0 0.0
    %841 = vmatpush1.msra.mxu0 %v144
    %842 = vmatprep.subr.mxu0 0.0
    %843 = vmatpush1.msra.mxu0 %v145
    %844 = vmatprep.subr.mxu0 0.0
    %845 = vmatpush1.msra.mxu0 %v146
    %846 = vmatprep.subr.mxu0 0.0
    %847 = vmatpush1.msra.mxu0 %v147
    %848 = vmatprep.subr.mxu0 0.0
    %849 = vmatpush1.msra.mxu0 %v148
    %850 = vmatprep.subr.mxu0 0.0
    %851 = vmatpush1.msra.mxu0 %v149
    %852 = vmatprep.mubr.f32.mxu0 %v473
    %853 = vmatmul.mubr.f32.gmra.mrb[0].mxu0 %v471
    %v854 = vpop.f32.mrb[0].mxu0
    %v855 = vadd.f32 %v785, %v854
    %v856 = vpop.f32.mrb[0].mxu0
    %857 = vdwg.mxu0
    %858 = vmatprep.subr.mxu0 0.0
    %859 = vmatpush1.msra.mxu0 %v150
    %860 = vmatprep.subr.mxu0 0.0
    %861 = vmatpush1.msra.mxu0 %v151
    %862 = vmatprep.subr.mxu0 0.0
    %863 = vmatpush1.msra.mxu0 %v152
    %864 = vmatprep.subr.mxu0 0.0
    %865 = vmatpush1.msra.mxu0 %v153
    %866 = vmatprep.subr.mxu0 0.0
    %867 = vmatpush1.msra.mxu0 %v154
    %868 = vmatprep.subr.mxu0 0.0
    %869 = vmatpush1.msra.mxu0 %v155
    %870 = vmatprep.subr.mxu0 0.0
    %871 = vmatpush1.msra.mxu0 %v156
    %872 = vmatprep.subr.mxu0 0.0
    %873 = vmatpush1.msra.mxu0 %v157
    %874 = vmatprep.subr.mxu0 0.0
    %875 = vmatpush1.msra.mxu0 %v158
    %876 = vmatprep.subr.mxu0 0.0
    %877 = vmatpush1.msra.mxu0 %v159
    %878 = vmatprep.subr.mxu0 0.0
    %879 = vmatpush1.msra.mxu0 %v160
    %880 = vmatprep.subr.mxu0 0.0
    %881 = vmatpush1.msra.mxu0 %v161
    %882 = vmatprep.subr.mxu0 0.0
    %883 = vmatpush1.msra.mxu0 %v162
    %884 = vmatprep.subr.mxu0 0.0
    %885 = vmatpush1.msra.mxu0 %v163
    %886 = vmatprep.subr.mxu0 0.0
    %887 = vmatpush1.msra.mxu0 %v164
    %888 = vmatprep.subr.mxu0 0.0
    %889 = vmatpush1.msra.mxu0 %v165
    %890 = vmatprep.subr.mxu0 0.0
    %891 = vmatpush1.msra.mxu0 %v166
    %892 = vmatprep.subr.mxu0 0.0
    %893 = vmatpush1.msra.mxu0 %v167
    %894 = vmatprep.subr.mxu0 0.0
    %895 = vmatpush1.msra.mxu0 %v168
    %896 = vmatprep.subr.mxu0 0.0
    %897 = vmatpush1.msra.mxu0 %v169
    %898 = vmatprep.subr.mxu0 0.0
    %899 = vmatpush1.msra.mxu0 %v170
    %900 = vmatprep.subr.mxu0 0.0
    %901 = vmatpush1.msra.mxu0 %v171
    %902 = vmatprep.subr.mxu0 0.0
    %903 = vmatpush1.msra.mxu0 %v172
    %904 = vmatprep.subr.mxu0 0.0
    %905 = vmatpush1.msra.mxu0 %v173
    %906 = vmatprep.subr.mxu0 0.0
    %907 = vmatpush1.msra.mxu0 %v174
    %908 = vmatprep.subr.mxu0 0.0
    %909 = vmatpush1.msra.mxu0 %v175
    %910 = vmatprep.subr.mxu0 0.0
    %911 = vmatpush1.msra.mxu0 %v176
    %912 = vmatprep.subr.mxu0 0.0
    %913 = vmatpush1.msra.mxu0 %v177
    %914 = vmatprep.subr.mxu0 0.0
    %915 = vmatpush1.msra.mxu0 %v178
    %916 = vmatprep.subr.mxu0 0.0
    %917 = vmatpush1.msra.mxu0 %v179
    %918 = vmatprep.subr.mxu0 0.0
    %919 = vmatpush1.msra.mxu0 %v180
    %920 = vmatprep.subr.mxu0 0.0
    %921 = vmatpush1.msra.mxu0 %v181
    %922 = vmatprep.mubr.f32.mxu0 %v489
    %923 = vmatmul.mubr.f32.gmra.mrb[0].mxu0 %v481
    %v924 = vpop.f32.mrb[0].mxu0
    %v925 = vadd.f32 %v855, %v924
    %v926 = vpop.f32.mrb[0].mxu0
    %927 = vdwg.mxu0
    %928 = vmatprep.subr.mxu0 0.0
    %929 = vmatpush1.msra.mxu0 %v182
    %930 = vmatprep.subr.mxu0 0.0
    %931 = vmatpush1.msra.mxu0 %v183
    %932 = vmatprep.subr.mxu0 0.0
    %933 = vmatpush1.msra.mxu0 %v184
    %934 = vmatprep.subr.mxu0 0.0
    %935 = vmatpush1.msra.mxu0 %v185
    %936 = vmatprep.subr.mxu0 0.0
    %937 = vmatpush1.msra.mxu0 %v186
    %938 = vmatprep.subr.mxu0 0.0
    %939 = vmatpush1.msra.mxu0 %v187
    %940 = vmatprep.subr.mxu0 0.0
    %941 = vmatpush1.msra.mxu0 %v188
    %942 = vmatprep.subr.mxu0 0.0
    %943 = vmatpush1.msra.mxu0 %v189
    %944 = vmatprep.subr.mxu0 0.0
    %945 = vmatpush1.msra.mxu0 %v190
    %946 = vmatprep.subr.mxu0 0.0
    %947 = vmatpush1.msra.mxu0 %v191
    %948 = vmatprep.subr.mxu0 0.0
    %949 = vmatpush1.msra.mxu0 %v192
    %950 = vmatprep.subr.mxu0 0.0
    %951 = vmatpush1.msra.mxu0 %v193
    %952 = vmatprep.subr.mxu0 0.0
    %953 = vmatpush1.msra.mxu0 %v194
    %954 = vmatprep.subr.mxu0 0.0
    %955 = vmatpush1.msra.mxu0 %v195
    %956 = vmatprep.subr.mxu0 0.0
    %957 = vmatpush1.msra.mxu0 %v196
    %958 = vmatprep.subr.mxu0 0.0
    %959 = vmatpush1.msra.mxu0 %v197
    %960 = vmatprep.subr.mxu0 0.0
    %961 = vmatpush1.msra.mxu0 %v198
    %962 = vmatprep.subr.mxu0 0.0
    %963 = vmatpush1.msra.mxu0 %v199
    %964 = vmatprep.subr.mxu0 0.0
    %965 = vmatpush1.msra.mxu0 %v200
    %966 = vmatprep.subr.mxu0 0.0
    %967 = vmatpush1.msra.mxu0 %v201
    %968 = vmatprep.subr.mxu0 0.0
    %969 = vmatpush1.msra.mxu0 %v202
    %970 = vmatprep.subr.mxu0 0.0
    %971 = vmatpush1.msra.mxu0 %v203
    %972 = vmatprep.subr.mxu0 0.0
    %973 = vmatpush1.msra.mxu0 %v204
    %974 = vmatprep.subr.mxu0 0.0
    %975 = vmatpush1.msra.mxu0 %v205
    %976 = vmatprep.subr.mxu0 0.0
    %977 = vmatpush1.msra.mxu0 %v206
    %978 = vmatprep.subr.mxu0 0.0
    %979 = vmatpush1.msra.mxu0 %v207
    %980 = vmatprep.subr.mxu0 0.0
    %981 = vmatpush1.msra.mxu0 %v208
    %982 = vmatprep.subr.mxu0 0.0
    %983 = vmatpush1.msra.mxu0 %v209
    %984 = vmatprep.subr.mxu0 0.0
    %985 = vmatpush1.msra.mxu0 %v210
    %986 = vmatprep.subr.mxu0 0.0
    %987 = vmatpush1.msra.mxu0 %v211
    %988 = vmatprep.subr.mxu0 0.0
    %989 = vmatpush1.msra.mxu0 %v212
    %990 = vmatprep.subr.mxu0 0.0
    %991 = vmatpush1.msra.mxu0 %v213
    %992 = vmatprep.mubr.f32.mxu0 %v490
    %993 = vmatmul.mubr.f32.gmra.mrb[0].mxu0 %v488
    %v994 = vpop.f32.mrb[0].mxu0
    %v995 = vadd.f32 %v925, %v994
    %v996 = vpop.f32.mrb[0].mxu0
    %997 = vdwg.mxu0
    %998 = vmatprep.subr.mxu0 0.0
    %999 = vmatpush1.msra.mxu0 %v214
    %1000 = vmatprep.subr.mxu0 0.0
    %1001 = vmatpush1.msra.mxu0 %v215
    %1002 = vmatprep.subr.mxu0 0.0
    %1003 = vmatpush1.msra.mxu0 %v216
    %1004 = vmatprep.subr.mxu0 0.0
    %1005 = vmatpush1.msra.mxu0 %v217
    %1006 = vmatprep.subr.mxu0 0.0
    %1007 = vmatpush1.msra.mxu0 %v218
    %1008 = vmatprep.subr.mxu0 0.0
    %1009 = vmatpush1.msra.mxu0 %v219
    %1010 = vmatprep.subr.mxu0 0.0
    %1011 = vmatpush1.msra.mxu0 %v220
    %1012 = vmatprep.subr.mxu0 0.0
    %1013 = vmatpush1.msra.mxu0 %v221
    %1014 = vmatprep.subr.mxu0 0.0
    %1015 = vmatpush1.msra.mxu0 %v222
    %1016 = vmatprep.subr.mxu0 0.0
    %1017 = vmatpush1.msra.mxu0 %v223
    %1018 = vmatprep.subr.mxu0 0.0
    %1019 = vmatpush1.msra.mxu0 %v224
    %1020 = vmatprep.subr.mxu0 0.0
    %1021 = vmatpush1.msra.mxu0 %v225
    %1022 = vmatprep.subr.mxu0 0.0
    %1023 = vmatpush1.msra.mxu0 %v226
    %1024 = vmatprep.subr.mxu0 0.0
    %1025 = vmatpush1.msra.mxu0 %v227
    %1026 = vmatprep.subr.mxu0 0.0
    %1027 = vmatpush1.msra.mxu0 %v228
    %1028 = vmatprep.subr.mxu0 0.0
    %1029 = vmatpush1.msra.mxu0 %v229
    %1030 = vmatprep.subr.mxu0 0.0
    %1031 = vmatpush1.msra.mxu0 %v230
    %1032 = vmatprep.subr.mxu0 0.0
    %1033 = vmatpush1.msra.mxu0 %v231
    %1034 = vmatprep.subr.mxu0 0.0
    %1035 = vmatpush1.msra.mxu0 %v232
    %1036 = vmatprep.subr.mxu0 0.0
    %1037 = vmatpush1.msra.mxu0 %v233
    %1038 = vmatprep.subr.mxu0 0.0
    %1039 = vmatpush1.msra.mxu0 %v234
    %1040 = vmatprep.subr.mxu0 0.0
    %1041 = vmatpush1.msra.mxu0 %v235
    %1042 = vmatprep.subr.mxu0 0.0
    %1043 = vmatpush1.msra.mxu0 %v236
    %1044 = vmatprep.subr.mxu0 0.0
    %1045 = vmatpush1.msra.mxu0 %v237
    %1046 = vmatprep.subr.mxu0 0.0
    %1047 = vmatpush1.msra.mxu0 %v238
    %1048 = vmatprep.subr.mxu0 0.0
    %1049 = vmatpush1.msra.mxu0 %v239
    %1050 = vmatprep.subr.mxu0 0.0
    %1051 = vmatpush1.msra.mxu0 %v240
    %1052 = vmatprep.subr.mxu0 0.0
    %1053 = vmatpush1.msra.mxu0 %v241
    %1054 = vmatprep.subr.mxu0 0.0
    %1055 = vmatpush1.msra.mxu0 %v242
    %1056 = vmatprep.subr.mxu0 0.0
    %1057 = vmatpush1.msra.mxu0 %v243
    %1058 = vmatprep.subr.mxu0 0.0
    %1059 = vmatpush1.msra.mxu0 %v244
    %1060 = vmatprep.subr.mxu0 0.0
    %1061 = vmatpush1.msra.mxu0 %v245
    %1062 = vmatprep.mubr.f32.mxu0 %v506
    %1063 = vmatmul.mubr.f32.gmra.mrb[0].mxu0 %v498
    %v1064 = vpop.f32.mrb[0].mxu0
    %v1065 = vadd.f32 %v995, %v1064
    %v1066 = vpop.f32.mrb[0].mxu0
    %1067 = vdwg.mxu0
    %1068 = vmatprep.subr.mxu0 0.0
    %1069 = vmatpush1.msra.mxu0 %v246
    %1070 = vmatprep.subr.mxu0 0.0
    %1071 = vmatpush1.msra.mxu0 %v247
    %1072 = vmatprep.subr.mxu0 0.0
    %1073 = vmatpush1.msra.mxu0 %v248
    %1074 = vmatprep.subr.mxu0 0.0
    %1075 = vmatpush1.msra.mxu0 %v249
    %1076 = vmatprep.subr.mxu0 0.0
    %1077 = vmatpush1.msra.mxu0 %v250
    %1078 = vmatprep.subr.mxu0 0.0
    %1079 = vmatpush1.msra.mxu0 %v251
    %1080 = vmatprep.subr.mxu0 0.0
    %1081 = vmatpush1.msra.mxu0 %v252
    %1082 = vmatprep.subr.mxu0 0.0
    %1083 = vmatpush1.msra.mxu0 %v253
    %1084 = vmatprep.subr.mxu0 0.0
    %1085 = vmatpush1.msra.mxu0 %v254
    %1086 = vmatprep.subr.mxu0 0.0
    %1087 = vmatpush1.msra.mxu0 %v255
    %1088 = vmatprep.subr.mxu0 0.0
    %1089 = vmatpush1.msra.mxu0 %v256
    %1090 = vmatprep.subr.mxu0 0.0
    %1091 = vmatpush1.msra.mxu0 %v257
    %1092 = vmatprep.subr.mxu0 0.0
    %1093 = vmatpush1.msra.mxu0 %v258
    %1094 = vmatprep.subr.mxu0 0.0
    %1095 = vmatpush1.msra.mxu0 %v259
    %1096 = vmatprep.subr.mxu0 0.0
    %1097 = vmatpush1.msra.mxu0 %v260
    %1098 = vmatprep.subr.mxu0 0.0
    %1099 = vmatpush1.msra.mxu0 %v261
    %1100 = vmatprep.subr.mxu0 0.0
    %1101 = vmatpush1.msra.mxu0 %v262
    %1102 = vmatprep.subr.mxu0 0.0
    %1103 = vmatpush1.msra.mxu0 %v263
    %1104 = vmatprep.subr.mxu0 0.0
    %1105 = vmatpush1.msra.mxu0 %v264
    %1106 = vmatprep.subr.mxu0 0.0
    %1107 = vmatpush1.msra.mxu0 %v265
    %1108 = vmatprep.subr.mxu0 0.0
    %1109 = vmatpush1.msra.mxu0 %v266
    %1110 = vmatprep.subr.mxu0 0.0
    %1111 = vmatpush1.msra.mxu0 %v267
    %1112 = vmatprep.subr.mxu0 0.0
    %1113 = vmatpush1.msra.mxu0 %v268
    %1114 = vmatprep.subr.mxu0 0.0
    %1115 = vmatpush1.msra.mxu0 %v269
    %1116 = vmatprep.subr.mxu0 0.0
    %1117 = vmatpush1.msra.mxu0 %v270
    %1118 = vmatprep.subr.mxu0 0.0
    %1119 = vmatpush1.msra.mxu0 %v271
    %1120 = vmatprep.subr.mxu0 0.0
    %1121 = vmatpush1.msra.mxu0 %v272
    %1122 = vmatprep.subr.mxu0 0.0
    %1123 = vmatpush1.msra.mxu0 %v273
    %1124 = vmatprep.subr.mxu0 0.0
    %1125 = vmatpush1.msra.mxu0 %v274
    %1126 = vmatprep.subr.mxu0 0.0
    %1127 = vmatpush1.msra.mxu0 %v275
    %1128 = vmatprep.subr.mxu0 0.0
    %1129 = vmatpush1.msra.mxu0 %v276
    %1130 = vmatprep.subr.mxu0 0.0
    %1131 = vmatpush1.msra.mxu0 %v277
    %1132 = vmatprep.mubr.f32.mxu0 %v507
    %1133 = vmatmul.mubr.f32.gmra.mrb[0].mxu0 %v505
    %v1134 = vpop.f32.mrb[0].mxu0
    %v1135 = vadd.f32 %v1065, %v1134
    %v1136 = vpop.f32.mrb[0].mxu0
    %1137 = vdwg.mxu0
    %1138 = vmatprep.subr.mxu0 0.0
    %1139 = vmatpush1.msra.mxu0 %v278
    %1140 = vmatprep.subr.mxu0 0.0
    %1141 = vmatpush1.msra.mxu0 %v279
    %1142 = vmatprep.subr.mxu0 0.0
    %1143 = vmatpush1.msra.mxu0 %v280
    %1144 = vmatprep.subr.mxu0 0.0
    %1145 = vmatpush1.msra.mxu0 %v281
    %1146 = vmatprep.subr.mxu0 0.0
    %1147 = vmatpush1.msra.mxu0 %v282
    %1148 = vmatprep.subr.mxu0 0.0
    %1149 = vmatpush1.msra.mxu0 %v283
    %1150 = vmatprep.subr.mxu0 0.0
    %1151 = vmatpush1.msra.mxu0 %v284
    %1152 = vmatprep.subr.mxu0 0.0
    %1153 = vmatpush1.msra.mxu0 %v285
    %1154 = vmatprep.subr.mxu0 0.0
    %1155 = vmatpush1.msra.mxu0 %v286
    %1156 = vmatprep.subr.mxu0 0.0
    %1157 = vmatpush1.msra.mxu0 %v287
    %1158 = vmatprep.subr.mxu0 0.0
    %1159 = vmatpush1.msra.mxu0 %v288
    %1160 = vmatprep.subr.mxu0 0.0
    %1161 = vmatpush1.msra.mxu0 %v289
    %1162 = vmatprep.subr.mxu0 0.0
    %1163 = vmatpush1.msra.mxu0 %v290
    %1164 = vmatprep.subr.mxu0 0.0
    %1165 = vmatpush1.msra.mxu0 %v291
    %1166 = vmatprep.subr.mxu0 0.0
    %1167 = vmatpush1.msra.mxu0 %v292
    %1168 = vmatprep.subr.mxu0 0.0
    %1169 = vmatpush1.msra.mxu0 %v293
    %1170 = vmatprep.subr.mxu0 0.0
    %1171 = vmatpush1.msra.mxu0 %v294
    %1172 = vmatprep.subr.mxu0 0.0
    %1173 = vmatpush1.msra.mxu0 %v295
    %1174 = vmatprep.subr.mxu0 0.0
    %1175 = vmatpush1.msra.mxu0 %v296
    %1176 = vmatprep.subr.mxu0 0.0
    %1177 = vmatpush1.msra.mxu0 %v297
    %1178 = vmatprep.subr.mxu0 0.0
    %1179 = vmatpush1.msra.mxu0 %v298
    %1180 = vmatprep.subr.mxu0 0.0
    %1181 = vmatpush1.msra.mxu0 %v299
    %1182 = vmatprep.subr.mxu0 0.0
    %1183 = vmatpush1.msra.mxu0 %v300
    %1184 = vmatprep.subr.mxu0 0.0
    %1185 = vmatpush1.msra.mxu0 %v301
    %1186 = vmatprep.subr.mxu0 0.0
    %1187 = vmatpush1.msra.mxu0 %v302
    %1188 = vmatprep.subr.mxu0 0.0
    %1189 = vmatpush1.msra.mxu0 %v303
    %1190 = vmatprep.subr.mxu0 0.0
    %1191 = vmatpush1.msra.mxu0 %v304
    %1192 = vmatprep.subr.mxu0 0.0
    %1193 = vmatpush1.msra.mxu0 %v305
    %1194 = vmatprep.subr.mxu0 0.0
    %1195 = vmatpush1.msra.mxu0 %v306
    %1196 = vmatprep.subr.mxu0 0.0
    %1197 = vmatpush1.msra.mxu0 %v307
    %1198 = vmatprep.subr.mxu0 0.0
    %1199 = vmatpush1.msra.mxu0 %v308
    %1200 = vmatprep.subr.mxu0 0.0
    %1201 = vmatpush1.msra.mxu0 %v309
    %1202 = vmatprep.mubr.f32.mxu0 %v523
    %1203 = vmatmul.mubr.f32.gmra.mrb[0].mxu0 %v515
    %v1204 = vpop.f32.mrb[0].mxu0
    %v1205 = vadd.f32 %v1135, %v1204
    %v1206 = vpop.f32.mrb[0].mxu0
    %1207 = vdwg.mxu0
    %1208 = vmatprep.subr.mxu0 0.0
    %1209 = vmatpush1.msra.mxu0 %v310
    %1210 = vmatprep.subr.mxu0 0.0
    %1211 = vmatpush1.msra.mxu0 %v311
    %1212 = vmatprep.subr.mxu0 0.0
    %1213 = vmatpush1.msra.mxu0 %v312
    %1214 = vmatprep.subr.mxu0 0.0
    %1215 = vmatpush1.msra.mxu0 %v313
    %1216 = vmatprep.subr.mxu0 0.0
    %1217 = vmatpush1.msra.mxu0 %v314
    %1218 = vmatprep.subr.mxu0 0.0
    %1219 = vmatpush1.msra.mxu0 %v315
    %1220 = vmatprep.subr.mxu0 0.0
    %1221 = vmatpush1.msra.mxu0 %v316
    %1222 = vmatprep.subr.mxu0 0.0
    %1223 = vmatpush1.msra.mxu0 %v317
    %1224 = vmatprep.subr.mxu0 0.0
    %1225 = vmatpush1.msra.mxu0 %v318
    %1226 = vmatprep.subr.mxu0 0.0
    %1227 = vmatpush1.msra.mxu0 %v319
    %1228 = vmatprep.subr.mxu0 0.0
    %1229 = vmatpush1.msra.mxu0 %v320
    %1230 = vmatprep.subr.mxu0 0.0
    %1231 = vmatpush1.msra.mxu0 %v321
    %1232 = vmatprep.subr.mxu0 0.0
    %1233 = vmatpush1.msra.mxu0 %v322
    %1234 = vmatprep.subr.mxu0 0.0
    %1235 = vmatpush1.msra.mxu0 %v323
    %1236 = vmatprep.subr.mxu0 0.0
    %1237 = vmatpush1.msra.mxu0 %v324
    %1238 = vmatprep.subr.mxu0 0.0
    %1239 = vmatpush1.msra.mxu0 %v325
    %1240 = vmatprep.subr.mxu0 0.0
    %1241 = vmatpush1.msra.mxu0 %v326
    %1242 = vmatprep.subr.mxu0 0.0
    %1243 = vmatpush1.msra.mxu0 %v327
    %1244 = vmatprep.subr.mxu0 0.0
    %1245 = vmatpush1.msra.mxu0 %v328
    %1246 = vmatprep.subr.mxu0 0.0
    %1247 = vmatpush1.msra.mxu0 %v329
    %1248 = vmatprep.subr.mxu0 0.0
    %1249 = vmatpush1.msra.mxu0 %v330
    %1250 = vmatprep.subr.mxu0 0.0
    %1251 = vmatpush1.msra.mxu0 %v331
    %1252 = vmatprep.subr.mxu0 0.0
    %1253 = vmatpush1.msra.mxu0 %v332
    %1254 = vmatprep.subr.mxu0 0.0
    %1255 = vmatpush1.msra.mxu0 %v333
    %1256 = vmatprep.subr.mxu0 0.0
    %1257 = vmatpush1.msra.mxu0 %v334
    %1258 = vmatprep.subr.mxu0 0.0
    %1259 = vmatpush1.msra.mxu0 %v335
    %1260 = vmatprep.subr.mxu0 0.0
    %1261 = vmatpush1.msra.mxu0 %v336
    %1262 = vmatprep.subr.mxu0 0.0
    %1263 = vmatpush1.msra.mxu0 %v337
    %1264 = vmatprep.subr.mxu0 0.0
    %1265 = vmatpush1.msra.mxu0 %v338
    %1266 = vmatprep.subr.mxu0 0.0
    %1267 = vmatpush1.msra.mxu0 %v339
    %1268 = vmatprep.subr.mxu0 0.0
    %1269 = vmatpush1.msra.mxu0 %v340
    %1270 = vmatprep.subr.mxu0 0.0
    %1271 = vmatpush1.msra.mxu0 %v341
    %1272 = vmatprep.mubr.f32.mxu0 %v524
    %1273 = vmatmul.mubr.f32.gmra.mrb[0].mxu0 %v522
    %v1274 = vpop.f32.mrb[0].mxu0
    %v1275 = vadd.f32 %v1205, %v1274
    %v1276 = vpop.f32.mrb[0].mxu0
    %1277 = vdwg.mxu0
    %1278 = vmatprep.subr.mxu0 0.0
    %1279 = vmatpush1.msra.mxu0 %v342
    %1280 = vmatprep.subr.mxu0 0.0
    %1281 = vmatpush1.msra.mxu0 %v343
    %1282 = vmatprep.subr.mxu0 0.0
    %1283 = vmatpush1.msra.mxu0 %v344
    %1284 = vmatprep.subr.mxu0 0.0
    %1285 = vmatpush1.msra.mxu0 %v345
    %1286 = vmatprep.subr.mxu0 0.0
    %1287 = vmatpush1.msra.mxu0 %v346
    %1288 = vmatprep.subr.mxu0 0.0
    %1289 = vmatpush1.msra.mxu0 %v347
    %1290 = vmatprep.subr.mxu0 0.0
    %1291 = vmatpush1.msra.mxu0 %v348
    %1292 = vmatprep.subr.mxu0 0.0
    %1293 = vmatpush1.msra.mxu0 %v349
    %1294 = vmatprep.subr.mxu0 0.0
    %1295 = vmatpush1.msra.mxu0 %v350
    %1296 = vmatprep.subr.mxu0 0.0
    %1297 = vmatpush1.msra.mxu0 %v351
    %1298 = vmatprep.subr.mxu0 0.0
    %1299 = vmatpush1.msra.mxu0 %v352
    %1300 = vmatprep.subr.mxu0 0.0
    %1301 = vmatpush1.msra.mxu0 %v353
    %1302 = vmatprep.subr.mxu0 0.0
    %1303 = vmatpush1.msra.mxu0 %v354
    %1304 = vmatprep.subr.mxu0 0.0
    %1305 = vmatpush1.msra.mxu0 %v355
    %1306 = vmatprep.subr.mxu0 0.0
    %1307 = vmatpush1.msra.mxu0 %v356
    %1308 = vmatprep.subr.mxu0 0.0
    %1309 = vmatpush1.msra.mxu0 %v357
    %1310 = vmatprep.subr.mxu0 0.0
    %1311 = vmatpush1.msra.mxu0 %v358
    %1312 = vmatprep.subr.mxu0 0.0
    %1313 = vmatpush1.msra.mxu0 %v359
    %1314 = vmatprep.subr.mxu0 0.0
    %1315 = vmatpush1.msra.mxu0 %v360
    %1316 = vmatprep.subr.mxu0 0.0
    %1317 = vmatpush1.msra.mxu0 %v361
    %1318 = vmatprep.subr.mxu0 0.0
    %1319 = vmatpush1.msra.mxu0 %v362
    %1320 = vmatprep.subr.mxu0 0.0
    %1321 = vmatpush1.msra.mxu0 %v363
    %1322 = vmatprep.subr.mxu0 0.0
    %1323 = vmatpush1.msra.mxu0 %v364
    %1324 = vmatprep.subr.mxu0 0.0
    %1325 = vmatpush1.msra.mxu0 %v365
    %1326 = vmatprep.subr.mxu0 0.0
    %1327 = vmatpush1.msra.mxu0 %v366
    %1328 = vmatprep.subr.mxu0 0.0
    %1329 = vmatpush1.msra.mxu0 %v367
    %1330 = vmatprep.subr.mxu0 0.0
    %1331 = vmatpush1.msra.mxu0 %v368
    %1332 = vmatprep.subr.mxu0 0.0
    %1333 = vmatpush1.msra.mxu0 %v369
    %1334 = vmatprep.subr.mxu0 0.0
    %1335 = vmatpush1.msra.mxu0 %v370
    %1336 = vmatprep.subr.mxu0 0.0
    %1337 = vmatpush1.msra.mxu0 %v371
    %1338 = vmatprep.subr.mxu0 0.0
    %1339 = vmatpush1.msra.mxu0 %v372
    %1340 = vmatprep.subr.mxu0 0.0
    %1341 = vmatpush1.msra.mxu0 %v373
    %1342 = vmatprep.mubr.f32.mxu0 %v540
    %1343 = vmatmul.mubr.f32.gmra.mrb[0].mxu0 %v532
    %v1344 = vpop.f32.mrb[0].mxu0
    %v1345 = vadd.f32 %v1275, %v1344
    %v1346 = vpop.f32.mrb[0].mxu0
    %1347 = vdwg.mxu0
    %1348 = vmatprep.subr.mxu0 0.0
    %1349 = vmatpush1.msra.mxu0 %v374
    %1350 = vmatprep.subr.mxu0 0.0
    %1351 = vmatpush1.msra.mxu0 %v375
    %1352 = vmatprep.subr.mxu0 0.0
    %1353 = vmatpush1.msra.mxu0 %v376
    %1354 = vmatprep.subr.mxu0 0.0
    %1355 = vmatpush1.msra.mxu0 %v377
    %1356 = vmatprep.subr.mxu0 0.0
    %1357 = vmatpush1.msra.mxu0 %v378
    %1358 = vmatprep.subr.mxu0 0.0
    %1359 = vmatpush1.msra.mxu0 %v379
    %1360 = vmatprep.subr.mxu0 0.0
    %1361 = vmatpush1.msra.mxu0 %v380
    %1362 = vmatprep.subr.mxu0 0.0
    %1363 = vmatpush1.msra.mxu0 %v381
    %1364 = vmatprep.subr.mxu0 0.0
    %1365 = vmatpush1.msra.mxu0 %v382
    %1366 = vmatprep.subr.mxu0 0.0
    %1367 = vmatpush1.msra.mxu0 %v383
    %1368 = vmatprep.subr.mxu0 0.0
    %1369 = vmatpush1.msra.mxu0 %v384
    %1370 = vmatprep.subr.mxu0 0.0
    %1371 = vmatpush1.msra.mxu0 %v385
    %1372 = vmatprep.subr.mxu0 0.0
    %1373 = vmatpush1.msra.mxu0 %v386
    %1374 = vmatprep.subr.mxu0 0.0
    %1375 = vmatpush1.msra.mxu0 %v387
    %1376 = vmatprep.subr.mxu0 0.0
    %1377 = vmatpush1.msra.mxu0 %v388
    %1378 = vmatprep.subr.mxu0 0.0
    %1379 = vmatpush1.msra.mxu0 %v389
    %1380 = vmatprep.subr.mxu0 0.0
    %1381 = vmatpush1.msra.mxu0 %v390
    %1382 = vmatprep.subr.mxu0 0.0
    %1383 = vmatpush1.msra.mxu0 %v391
    %1384 = vmatprep.subr.mxu0 0.0
    %1385 = vmatpush1.msra.mxu0 %v392
    %1386 = vmatprep.subr.mxu0 0.0
    %1387 = vmatpush1.msra.mxu0 %v393
    %1388 = vmatprep.subr.mxu0 0.0
    %1389 = vmatpush1.msra.mxu0 %v394
    %1390 = vmatprep.subr.mxu0 0.0
    %1391 = vmatpush1.msra.mxu0 %v395
    %1392 = vmatprep.subr.mxu0 0.0
    %1393 = vmatpush1.msra.mxu0 %v396
    %1394 = vmatprep.subr.mxu0 0.0
    %1395 = vmatpush1.msra.mxu0 %v397
    %1396 = vmatprep.subr.mxu0 0.0
    %1397 = vmatpush1.msra.mxu0 %v398
    %1398 = vmatprep.subr.mxu0 0.0
    %1399 = vmatpush1.msra.mxu0 %v399
    %1400 = vmatprep.subr.mxu0 0.0
    %1401 = vmatpush1.msra.mxu0 %v400
    %1402 = vmatprep.subr.mxu0 0.0
    %1403 = vmatpush1.msra.mxu0 %v401
    %1404 = vmatprep.subr.mxu0 0.0
    %1405 = vmatpush1.msra.mxu0 %v402
    %1406 = vmatprep.subr.mxu0 0.0
    %1407 = vmatpush1.msra.mxu0 %v403
    %1408 = vmatprep.subr.mxu0 0.0
    %1409 = vmatpush1.msra.mxu0 %v404
    %1410 = vmatprep.subr.mxu0 0.0
    %1411 = vmatpush1.msra.mxu0 %v405
    %1412 = vmatprep.mubr.f32.mxu0 %v541
    %1413 = vmatmul.mubr.f32.gmra.mrb[0].mxu0 %v539
    %v1414 = vpop.f32.mrb[0].mxu0
    %v1415 = vadd.f32 %v1345, %v1414
    %v1416 = vpop.f32.mrb[0].mxu0
    %1417 = vdwg.mxu0
    %1418 = vmatprep.subr.mxu0 0.0
    %1419 = vmatpush1.msra.mxu0 %v406
    %1420 = vmatprep.subr.mxu0 0.0
    %1421 = vmatpush1.msra.mxu0 %v407
    %1422 = vmatprep.subr.mxu0 0.0
    %1423 = vmatpush1.msra.mxu0 %v408
    %1424 = vmatprep.subr.mxu0 0.0
    %1425 = vmatpush1.msra.mxu0 %v409
    %1426 = vmatprep.subr.mxu0 0.0
    %1427 = vmatpush1.msra.mxu0 %v410
    %1428 = vmatprep.subr.mxu0 0.0
    %1429 = vmatpush1.msra.mxu0 %v411
    %1430 = vmatprep.subr.mxu0 0.0
    %1431 = vmatpush1.msra.mxu0 %v412
    %1432 = vmatprep.subr.mxu0 0.0
    %1433 = vmatpush1.msra.mxu0 %v413
    %1434 = vmatprep.subr.mxu0 0.0
    %1435 = vmatpush1.msra.mxu0 %v414
    %1436 = vmatprep.subr.mxu0 0.0
    %1437 = vmatpush1.msra.mxu0 %v415
    %1438 = vmatprep.subr.mxu0 0.0
    %1439 = vmatpush1.msra.mxu0 %v416
    %1440 = vmatprep.subr.mxu0 0.0
    %1441 = vmatpush1.msra.mxu0 %v417
    %1442 = vmatprep.subr.mxu0 0.0
    %1443 = vmatpush1.msra.mxu0 %v418
    %1444 = vmatprep.subr.mxu0 0.0
    %1445 = vmatpush1.msra.mxu0 %v419
    %1446 = vmatprep.subr.mxu0 0.0
    %1447 = vmatpush1.msra.mxu0 %v420
    %1448 = vmatprep.subr.mxu0 0.0
    %1449 = vmatpush1.msra.mxu0 %v421
    %1450 = vmatprep.subr.mxu0 0.0
    %1451 = vmatpush1.msra.mxu0 %v422
    %1452 = vmatprep.subr.mxu0 0.0
    %1453 = vmatpush1.msra.mxu0 %v423
    %1454 = vmatprep.subr.mxu0 0.0
    %1455 = vmatpush1.msra.mxu0 %v424
    %1456 = vmatprep.subr.mxu0 0.0
    %1457 = vmatpush1.msra.mxu0 %v425
    %1458 = vmatprep.subr.mxu0 0.0
    %1459 = vmatpush1.msra.mxu0 0.0
    %1460 = vmatprep.subr.mxu0 0.0
    %1461 = vmatpush1.msra.mxu0 0.0
    %1462 = vmatprep.subr.mxu0 0.0
    %1463 = vmatpush1.msra.mxu0 0.0
    %1464 = vmatprep.subr.mxu0 0.0
    %1465 = vmatpush1.msra.mxu0 0.0
    %1466 = vmatprep.subr.mxu0 0.0
    %1467 = vmatpush1.msra.mxu0 0.0
    %1468 = vmatprep.subr.mxu0 0.0
    %1469 = vmatpush1.msra.mxu0 0.0
    %1470 = vmatprep.subr.mxu0 0.0
    %1471 = vmatpush1.msra.mxu0 0.0
    %1472 = vmatprep.subr.mxu0 0.0
    %1473 = vmatpush1.msra.mxu0 0.0
    %1474 = vmatprep.subr.mxu0 0.0
    %1475 = vmatpush1.msra.mxu0 0.0
    %1476 = vmatprep.subr.mxu0 0.0
    %1477 = vmatpush1.msra.mxu0 0.0
    %1478 = vmatprep.subr.mxu0 0.0
    %1479 = vmatpush1.msra.mxu0 0.0
    %1480 = vmatprep.subr.mxu0 0.0
    %1481 = vmatpush1.msra.mxu0 0.0
    %1482 = vmatprep.mubr.f32.mxu0 %v576
    %1483 = vmatmul.mubr.f32.gmra.mrb[0].mxu0 %v548
    %v1484 = vpop.f32.mrb[0].mxu0
    %v1485 = vadd.f32 %v1415, %v1484
    %v1486 = vpop.f32.mrb[0].mxu0
    %1487 = vdwg.mxu0
    %1488 = vst [vmem:[#allocation2] sm:$0x3] %v1485
    // Predicated region
    $region14: #{temporal_pooling_phn.1} parent=1 // pred_check
      _
    $region15: #{temporal_pooling_phn.1} parent=1 // pred_check_branch
      %1490 = sbr.rel (0) target = $region17
    $region16: #{temporal_pooling_phn.1} parent=1 // pred_region
      %s1492 = ssub.s32 32, 32
      %1493 = vsyncadd [#allocation3], %s1492
      %s1495 = sshll.u32 [#allocation2], 4
      %s1496 = int_to_ptr.vmem [resolvable:$true] %s1495
      %1498 = dma.vmem_to_hbm [thread:$0]  %s1496, 32, %s3, [#allocation3]
    $region17: #{temporal_pooling_phn.1} parent=1 // pred_fallthru
      _
    // Predicated region
    $region18: #{temporal_pooling_phn.1} parent=1 // pred_check
      _
    $region19: #{temporal_pooling_phn.1} parent=1 // pred_check_branch
      %1500 = sbr.rel (0) target = $region21
    $region20: #{temporal_pooling_phn.1} parent=1 // pred_region
      %1501 = dma.done [#allocation3], 32
    $region21: #{temporal_pooling_phn.1} parent=1 // pred_fallthru
      _
    %1502 = vsyncpa [#allocation3], 1

</llo_original>
